<compile_context>
chip_gen: v5e
topology: v5e:2x2
jax: 0.10.0
libtpu: 0.0.40
codegen_flags: <defaults>
</compile_context>

<pallas_src>
import functools

import jax
import jax.numpy as jnp
from jax.experimental import pallas as pl
from jax.experimental.pallas import tpu as pltpu


# ----------------------------- fused kernel ------------------------------

def graphnet_kernel(adj_ref, x0_ref, onehot_ref, same_ref,
                    wl1_ref, bl1_ref, wr1_ref, pw1_ref,
                    wl2_ref, bl2_ref, wr2_ref, pw2_ref,
                    wl3_ref, bl3_ref, wr3_ref, pw3_ref,
                    w1_ref, b1_ref, w2_ref, b2_ref, w3_ref, b3_ref,
                    o_ref, *, ratio):
    f32, bf16 = jnp.float32, jnp.bfloat16
    N = adj_ref.shape[0]
    G = onehot_ref.shape[0]
    F = wl1_ref.shape[1]

    adj = adj_ref[...]                      # (N, N) bf16: adj[i, j] = #edges j -> i
    x = x0_ref[...]                         # (N, emb) f32 embedded features
    onehot = onehot_ref[...]                # (G, N) f32 graph membership
    same = same_ref[...]                    # (N, N) f32: batch[i] == batch[j]

    # Live-node mask as a column vector. Nodes are never physically removed:
    # dead rows of x are forced to 0 and dead sources are excluded from the
    # mean aggregation through the mask — equivalent to node removal.
    mask = jnp.ones((N, 1), f32)

    # Hoisted broadcasts / iotas (JAX does not CSE broadcast_in_dim).
    ii = jax.lax.broadcasted_iota(jnp.int32, (N, N), 0)   # target / row index
    jj = jax.lax.broadcasted_iota(jnp.int32, (N, N), 1)   # source / col index
    eye = ii == jj

    readout = jnp.zeros((G, F), f32)

    layers = ((wl1_ref, bl1_ref, wr1_ref, pw1_ref),
              (wl2_ref, bl2_ref, wr2_ref, pw2_ref),
              (wl3_ref, bl3_ref, wr3_ref, pw3_ref))

    for wl_ref, bl_ref, wr_ref, pw_ref in layers:          # unrolled, 3 layers
        # ------------- SAGEConv (mean aggregation over live sources) + ReLU --
        # Degree over live sources only; exact (small integer counts in bf16).
        deg = jnp.dot(adj, mask.astype(bf16), preferred_element_type=f32)   # (N,1)
        inv_deg = pl.reciprocal(jnp.maximum(deg, 1.0), approx=True)         # EUP
        # Dead rows of x are exactly 0, so adj @ x already sums live sources.
        aggr = jnp.dot(adj, x.astype(bf16), preferred_element_type=f32) * inv_deg
        h = jnp.dot(aggr.astype(bf16), wl_ref[...].astype(bf16),
                    preferred_element_type=f32) + bl_ref[...]
        h = h + jnp.dot(x.astype(bf16), wr_ref[...].astype(bf16),
                        preferred_element_type=f32)
        h = jnp.maximum(h, 0.0)                                              # (N,F)

        # ------------- TopKPooling: score + per-graph top-ceil(ratio*n) ------
        pw = pw_ref[...]                                                     # (F,1)
        inv_norm = jax.lax.rsqrt(jnp.sum(pw * pw, axis=0, keepdims=True))    # (1,1)
        score = jnp.tanh(jnp.dot(h, pw, preferred_element_type=f32) * inv_norm)
        s_col = jnp.where(mask > 0.0, score, -1e30)                          # (N,1)
        # Row-oriented (lane-axis) copy of the scores, built on-chip via
        # diagonal select + sublane reduce (no HBM round trip, no transpose op).
        s_row = jnp.sum(jnp.where(eye, s_col, 0.0), axis=0, keepdims=True)   # (1,N)

        # rank[i] = # live same-graph nodes strictly better than i
        # (higher score wins, ties broken by lower node index).
        better = (s_row > s_col) | ((s_row == s_col) & (jj < ii))            # (N,N)
        rank = jnp.sum(jnp.where(better, same, 0.0), axis=1, keepdims=True)  # (N,1)

        # keep i  <=>  rank[i] < ceil(ratio * n_live(graph_i)); rank is
        # integral, so rank < ceil(y) <=> rank < y and no ceil op is needed.
        n_live = jnp.dot(same, mask, preferred_element_type=f32)             # (N,1)
        keep = (rank < ratio * n_live).astype(f32)
        mask = mask * keep                                                   # monotone

        # x <- x[perm] * score[perm] (dead rows forced to exactly 0).
        x = h * jnp.where(mask > 0.0, score, 0.0)

        # ------------- global mean pool over live nodes of each graph --------
        cnt = jnp.dot(onehot, mask, preferred_element_type=f32)              # (G,1)
        inv_cnt = pl.reciprocal(jnp.maximum(cnt, 1.0), approx=True)
        readout = readout + jnp.dot(onehot, x, preferred_element_type=f32) * inv_cnt

    # ------------- MLP head: relu(lin1) -> relu(lin2) -> sigmoid(lin3) -------
    hh = jnp.dot(readout, w1_ref[...], preferred_element_type=f32) + b1_ref[...]
    hh = jnp.maximum(hh, 0.0)
    hh = jnp.dot(hh, w2_ref[...], preferred_element_type=f32) + b2_ref[...]
    hh = jnp.maximum(hh, 0.0)
    # TODO(synk): F.dropout(p=0.5) skipped — inference semantics (training=False).
    z = jnp.dot(hh, w3_ref[...], preferred_element_type=f32) + b3_ref[...]
    # Single tiny (G,1) store is the only HBM write of the whole network.
    o_ref[...] = jax.nn.sigmoid(z)


# --------------------------- pallas_call glue -----------------------------

def _zmap(nd):
    return lambda i: (0,) * nd


def _full_spec(shape):
    return pl.BlockSpec(shape, _zmap(len(shape)))


def graphnet_forward(params, x_idx, edge_index, batch, num_graphs, ratio=0.8):
    N = x_idx.shape[0]
    # item_embedding(x).squeeze(1)  (gather stays in XLA glue)
    x0 = jnp.take(params["embedding"], x_idx[:, 0], axis=0)                  # (N, emb)
    # Dense adjacency with multiplicity, A[target, source]; streamed as bf16
    # (exact for small integer edge counts) — scatter-add stays in XLA glue.
    src, dst = edge_index[0], edge_index[1]
    adj = (jnp.zeros((N, N), jnp.float32).at[dst, src].add(1.0)).astype(jnp.bfloat16)
    gids = jnp.arange(num_graphs)
    onehot = (batch[None, :] == gids[:, None]).astype(jnp.float32)           # (G, N)
    same = (batch[:, None] == batch[None, :]).astype(jnp.float32)            # (N, N)

    wl1, bl1, wr1 = params["conv1"]; pw1 = params["pool1"]
    wl2, bl2, wr2 = params["conv2"]; pw2 = params["pool2"]
    wl3, bl3, wr3 = params["conv3"]; pw3 = params["pool3"]
    w1, b1 = params["lin1"]; w2, b2 = params["lin2"]; w3, b3 = params["lin3"]

    args = (adj, x0, onehot, same,
            wl1, bl1, wr1, pw1, wl2, bl2, wr2, pw2, wl3, bl3, wr3, pw3,
            w1, b1, w2, b2, w3, b3)

    out = pl.pallas_call(
        functools.partial(graphnet_kernel, ratio=ratio),
        grid=(1,),
        in_specs=[_full_spec(a.shape) for a in args],
        out_specs=_full_spec((num_graphs, 1)),
        out_shape=jax.ShapeDtypeStruct((num_graphs, 1), jnp.float32),
        compiler_params=pltpu.CompilerParams(dimension_semantics=("arbitrary",)),
    )(*args)
    return out[:, 0]                                                         # .squeeze(1)


# ------------------------- deterministic params ---------------------------

def init_params(key, emb_dim):
    keys = jax.random.split(key, 13)

    def lin(k, fan_in, fan_out):
        bound = 1.0 / jnp.sqrt(jnp.float32(fan_in))
        kw, kb = jax.random.split(k)
        w = jax.random.uniform(kw, (fan_in, fan_out), jnp.float32, -bound, bound)
        b = jax.random.uniform(kb, (1, fan_out), jnp.float32, -bound, bound)
        return w, b

    params = {}
    params["embedding"] = jax.random.normal(keys[0], (emb_dim + 10, emb_dim), jnp.float32)
    # SAGEConv = lin_l(mean-aggregated neighbors, with bias) + lin_r(root, no bias).
    wl1, bl1 = lin(keys[1], emb_dim, 128); wr1, _ = lin(keys[2], emb_dim, 128)
    params["conv1"] = (wl1, bl1, wr1)
    wl2, bl2 = lin(keys[3], 128, 128); wr2, _ = lin(keys[4], 128, 128)
    params["conv2"] = (wl2, bl2, wr2)
    wl3, bl3 = lin(keys[5], 128, 128); wr3, _ = lin(keys[6], 128, 128)
    params["conv3"] = (wl3, bl3, wr3)
    params["pool1"] = jax.random.normal(keys[7], (128, 1), jnp.float32)
    params["pool2"] = jax.random.normal(keys[8], (128, 1), jnp.float32)
    params["pool3"] = jax.random.normal(keys[9], (128, 1), jnp.float32)
    params["lin1"] = lin(keys[10], 128, 128)
    params["lin2"] = lin(keys[11], 128, 64)
    params["lin3"] = lin(keys[12], 64, 1)
    # NOTE: bn1/bn2 exist in __init__ but are never used in forward(); not materialized.
    return params


# ---------------------------------- main -----------------------------------

if __name__ == "__main__":
    emb_dim = 16
    num_graphs = 2
    nodes_per_graph = 16
    N = num_graphs * nodes_per_graph
    E_per = 40

    key = jax.random.PRNGKey(0)
    kp, kx, ke1, ke2, ke3, ke4 = jax.random.split(key, 6)
    params = init_params(kp, emb_dim)

    x_idx = jax.random.randint(kx, (N, 1), 0, emb_dim + 10, dtype=jnp.int32)
    src0 = jax.random.randint(ke1, (E_per,), 0, nodes_per_graph, dtype=jnp.int32)
    dst0 = jax.random.randint(ke2, (E_per,), 0, nodes_per_graph, dtype=jnp.int32)
    src1 = jax.random.randint(ke3, (E_per,), nodes_per_graph, N, dtype=jnp.int32)
    dst1 = jax.random.randint(ke4, (E_per,), nodes_per_graph, N, dtype=jnp.int32)
    edge_index = jnp.stack([jnp.concatenate([src0, src1]),
                            jnp.concatenate([dst0, dst1])])
    batch = jnp.repeat(jnp.arange(num_graphs, dtype=jnp.int32), nodes_per_graph)

    fwd = jax.jit(functools.partial(graphnet_forward, num_graphs=num_graphs))
    out = fwd(params, x_idx, edge_index, batch)
    jax.block_until_ready(out)
    assert out.shape == (num_graphs,)
    assert bool(jnp.all(jnp.isfinite(out)))
    print("KERNEL_OK")
</pallas_src>

<mosaic_0001>
module attributes {stable_mosaic.version = 11 : i64} {
  func.func @graphnet_kernel(%arg0: i32, %arg1: memref<32x32xbf16, #tpu.memory_space<vmem>>, %arg2: memref<32x16xf32, #tpu.memory_space<vmem>>, %arg3: memref<2x32xf32, #tpu.memory_space<vmem>>, %arg4: memref<32x32xf32, #tpu.memory_space<vmem>>, %arg5: memref<16x128xf32, #tpu.memory_space<vmem>>, %arg6: memref<1x128xf32, #tpu.memory_space<vmem>>, %arg7: memref<16x128xf32, #tpu.memory_space<vmem>>, %arg8: memref<128x1xf32, #tpu.memory_space<vmem>>, %arg9: memref<128x128xf32, #tpu.memory_space<vmem>>, %arg10: memref<1x128xf32, #tpu.memory_space<vmem>>, %arg11: memref<128x128xf32, #tpu.memory_space<vmem>>, %arg12: memref<128x1xf32, #tpu.memory_space<vmem>>, %arg13: memref<128x128xf32, #tpu.memory_space<vmem>>, %arg14: memref<1x128xf32, #tpu.memory_space<vmem>>, %arg15: memref<128x128xf32, #tpu.memory_space<vmem>>, %arg16: memref<128x1xf32, #tpu.memory_space<vmem>>, %arg17: memref<128x128xf32, #tpu.memory_space<vmem>>, %arg18: memref<1x128xf32, #tpu.memory_space<vmem>>, %arg19: memref<128x64xf32, #tpu.memory_space<vmem>>, %arg20: memref<1x64xf32, #tpu.memory_space<vmem>>, %arg21: memref<64x1xf32, #tpu.memory_space<vmem>>, %arg22: memref<1x1xf32, #tpu.memory_space<vmem>>, %arg23: memref<2x1xf32, #tpu.memory_space<vmem>>) attributes {dimension_semantics = [#tpu.dimension_semantics<arbitrary>], iteration_bounds = array<i64: 1>, scalar_prefetch = 0 : i64, scratch_operands = 0 : i64, tpu.core_type = #tpu.core_type<tc>, window_params = [{pipeline_mode = #tpu.pipeline_mode<synchronous>, transform_indices = @transform_0, window_bounds = array<i64: 32, 32>}, {pipeline_mode = #tpu.pipeline_mode<synchronous>, transform_indices = @transform_1, window_bounds = array<i64: 32, 16>}, {pipeline_mode = #tpu.pipeline_mode<synchronous>, transform_indices = @transform_2, window_bounds = array<i64: 2, 32>}, {pipeline_mode = #tpu.pipeline_mode<synchronous>, transform_indices = @transform_3, window_bounds = array<i64: 32, 32>}, {pipeline_mode = #tpu.pipeline_mode<synchronous>, transform_indices = @transform_4, window_bounds = array<i64: 16, 128>}, {pipeline_mode = #tpu.pipeline_mode<synchronous>, transform_indices = @transform_5, window_bounds = array<i64: 1, 128>}, {pipeline_mode = #tpu.pipeline_mode<synchronous>, transform_indices = @transform_6, window_bounds = array<i64: 16, 128>}, {pipeline_mode = #tpu.pipeline_mode<synchronous>, transform_indices = @transform_7, window_bounds = array<i64: 128, 1>}, {pipeline_mode = #tpu.pipeline_mode<synchronous>, transform_indices = @transform_8, window_bounds = array<i64: 128, 128>}, {pipeline_mode = #tpu.pipeline_mode<synchronous>, transform_indices = @transform_9, window_bounds = array<i64: 1, 128>}, {pipeline_mode = #tpu.pipeline_mode<synchronous>, transform_indices = @transform_10, window_bounds = array<i64: 128, 128>}, {pipeline_mode = #tpu.pipeline_mode<synchronous>, transform_indices = @transform_11, window_bounds = array<i64: 128, 1>}, {pipeline_mode = #tpu.pipeline_mode<synchronous>, transform_indices = @transform_12, window_bounds = array<i64: 128, 128>}, {pipeline_mode = #tpu.pipeline_mode<synchronous>, transform_indices = @transform_13, window_bounds = array<i64: 1, 128>}, {pipeline_mode = #tpu.pipeline_mode<synchronous>, transform_indices = @transform_14, window_bounds = array<i64: 128, 128>}, {pipeline_mode = #tpu.pipeline_mode<synchronous>, transform_indices = @transform_15, window_bounds = array<i64: 128, 1>}, {pipeline_mode = #tpu.pipeline_mode<synchronous>, transform_indices = @transform_16, window_bounds = array<i64: 128, 128>}, {pipeline_mode = #tpu.pipeline_mode<synchronous>, transform_indices = @transform_17, window_bounds = array<i64: 1, 128>}, {pipeline_mode = #tpu.pipeline_mode<synchronous>, transform_indices = @transform_18, window_bounds = array<i64: 128, 64>}, {pipeline_mode = #tpu.pipeline_mode<synchronous>, transform_indices = @transform_19, window_bounds = array<i64: 1, 64>}, {pipeline_mode = #tpu.pipeline_mode<synchronous>, transform_indices = @transform_20, window_bounds = array<i64: 64, 1>}, {pipeline_mode = #tpu.pipeline_mode<synchronous>, transform_indices = @transform_21, window_bounds = array<i64: 1, 1>}, {pipeline_mode = #tpu.pipeline_mode<synchronous>, transform_indices = @transform_22, window_bounds = array<i64: 2, 1>}]} {
    %c0 = arith.constant 0 : index
    %c0_0 = arith.constant 0 : index
    %0 = vector.load %arg1[%c0, %c0_0] : memref<32x32xbf16, #tpu.memory_space<vmem>>, vector<32x32xbf16>
    %c0_1 = arith.constant 0 : index
    %c0_2 = arith.constant 0 : index
    %1 = vector.load %arg2[%c0_1, %c0_2] : memref<32x16xf32, #tpu.memory_space<vmem>>, vector<32x16xf32>
    %c0_3 = arith.constant 0 : index
    %c0_4 = arith.constant 0 : index
    %2 = vector.load %arg3[%c0_3, %c0_4] : memref<2x32xf32, #tpu.memory_space<vmem>>, vector<2x32xf32>
    %c0_5 = arith.constant 0 : index
    %c0_6 = arith.constant 0 : index
    %3 = vector.load %arg4[%c0_5, %c0_6] : memref<32x32xf32, #tpu.memory_space<vmem>>, vector<32x32xf32>
    %cst = arith.constant 1.000000e+00 : f32
    %4 = vector.broadcast %cst : f32 to vector<32x1xf32>
    %5 = tpu.iota {dimensions = array<i32: 0>} : vector<32x32xi32>
    %6 = tpu.iota {dimensions = array<i32: 1>} : vector<32x32xi32>
    %7 = arith.cmpi eq, %5, %6 : vector<32x32xi32>
    %cst_7 = arith.constant 0.000000e+00 : f32
    %8 = vector.broadcast %cst_7 : f32 to vector<2x128xf32>
    %9 = arith.truncf %4 : vector<32x1xf32> to vector<32x1xbf16>
    %cst_8 = arith.constant dense<0.000000e+00> : vector<32x1xf32>
    %10 = tpu.matmul %0, %9, %cst_8 {dimension_numbers = #tpu.dot_dimension_numbers<[1], [0], [0], [1], [0, 0, 1, 1], [], []>} : vector<32x32xbf16>, vector<32x1xbf16>, vector<32x1xf32> -> vector<32x1xf32>
    %cst_9 = arith.constant 1.000000e+00 : f32
    %11 = vector.broadcast %cst_9 : f32 to vector<32x1xf32>
    %12 = arith.maximumf %10, %11 : vector<32x1xf32>
    %13 = tpu.reciprocal %12 {approx = true} : vector<32x1xf32> -> vector<32x1xf32>
    %14 = arith.truncf %1 : vector<32x16xf32> to vector<32x16xbf16>
    %cst_10 = arith.constant dense<0.000000e+00> : vector<32x16xf32>
    %15 = tpu.matmul %0, %14, %cst_10 {dimension_numbers = #tpu.dot_dimension_numbers<[1], [0], [0], [1], [0, 0, 1, 1], [], []>} : vector<32x32xbf16>, vector<32x16xbf16>, vector<32x16xf32> -> vector<32x16xf32>
    %16 = vector.broadcast %13 : vector<32x1xf32> to vector<32x16xf32>
    %17 = arith.mulf %15, %16 : vector<32x16xf32>
    %18 = arith.truncf %17 : vector<32x16xf32> to vector<32x16xbf16>
    %c0_11 = arith.constant 0 : index
    %c0_12 = arith.constant 0 : index
    %19 = vector.load %arg5[%c0_11, %c0_12] : memref<16x128xf32, #tpu.memory_space<vmem>>, vector<16x128xf32>
    %20 = arith.truncf %19 : vector<16x128xf32> to vector<16x128xbf16>
    %cst_13 = arith.constant dense<0.000000e+00> : vector<32x128xf32>
    %21 = tpu.matmul %18, %20, %cst_13 {dimension_numbers = #tpu.dot_dimension_numbers<[1], [0], [0], [1], [0, 0, 1, 1], [], []>} : vector<32x16xbf16>, vector<16x128xbf16>, vector<32x128xf32> -> vector<32x128xf32>
    %c0_14 = arith.constant 0 : index
    %c0_15 = arith.constant 0 : index
    %22 = vector.load %arg6[%c0_14, %c0_15] : memref<1x128xf32, #tpu.memory_space<vmem>>, vector<1x128xf32>
    %23 = vector.broadcast %22 : vector<1x128xf32> to vector<32x128xf32>
    %24 = arith.addf %21, %23 : vector<32x128xf32>
    %25 = arith.truncf %1 : vector<32x16xf32> to vector<32x16xbf16>
    %c0_16 = arith.constant 0 : index
    %c0_17 = arith.constant 0 : index
    %26 = vector.load %arg7[%c0_16, %c0_17] : memref<16x128xf32, #tpu.memory_space<vmem>>, vector<16x128xf32>
    %27 = arith.truncf %26 : vector<16x128xf32> to vector<16x128xbf16>
    %cst_18 = arith.constant dense<0.000000e+00> : vector<32x128xf32>
    %28 = tpu.matmul %25, %27, %cst_18 {dimension_numbers = #tpu.dot_dimension_numbers<[1], [0], [0], [1], [0, 0, 1, 1], [], []>} : vector<32x16xbf16>, vector<16x128xbf16>, vector<32x128xf32> -> vector<32x128xf32>
    %29 = arith.addf %24, %28 : vector<32x128xf32>
    %cst_19 = arith.constant 0.000000e+00 : f32
    %30 = vector.broadcast %cst_19 : f32 to vector<32x128xf32>
    %31 = arith.maximumf %29, %30 : vector<32x128xf32>
    %c0_20 = arith.constant 0 : index
    %c0_21 = arith.constant 0 : index
    %32 = vector.load %arg8[%c0_20, %c0_21] : memref<128x1xf32, #tpu.memory_space<vmem>>, vector<128x1xf32>
    %33 = arith.mulf %32, %32 : vector<128x1xf32>
    %cst_22 = arith.constant dense<0.000000e+00> : vector<1xf32>
    %34 = vector.multi_reduction <add>, %33, %cst_22 [0] : vector<128x1xf32> to vector<1xf32>
    %35 = vector.shape_cast %34 : vector<1xf32> to vector<1x1xf32>
    %36 = math.rsqrt %35 : vector<1x1xf32>
    %cst_23 = arith.constant dense<0.000000e+00> : vector<32x1xf32>
    %37 = tpu.matmul %31, %32, %cst_23 {dimension_numbers = #tpu.dot_dimension_numbers<[1], [0], [0], [1], [0, 0, 1, 1], [], []>} : vector<32x128xf32>, vector<128x1xf32>, vector<32x1xf32> -> vector<32x1xf32>
    %38 = vector.broadcast %36 : vector<1x1xf32> to vector<32x1xf32>
    %39 = arith.mulf %37, %38 : vector<32x1xf32>
    %40 = math.tanh %39 : vector<32x1xf32>
    %cst_24 = arith.constant 0.000000e+00 : f32
    %41 = vector.broadcast %cst_24 : f32 to vector<32x1xf32>
    %42 = arith.cmpf ogt, %4, %41 : vector<32x1xf32>
    %cst_25 = arith.constant -1.000000e+30 : f32
    %43 = vector.broadcast %cst_25 : f32 to vector<32x1xf32>
    %44 = arith.select %42, %40, %43 : vector<32x1xi1>, vector<32x1xf32>
    %cst_26 = arith.constant 0.000000e+00 : f32
    %45 = vector.shape_cast %44 : vector<32x1xf32> to vector<32x1xf32>
    %46 = vector.broadcast %45 : vector<32x1xf32> to vector<32x32xf32>
    %47 = vector.broadcast %cst_26 : f32 to vector<32x32xf32>
    %48 = arith.select %7, %46, %47 : vector<32x32xi1>, vector<32x32xf32>
    %cst_27 = arith.constant dense<0.000000e+00> : vector<32xf32>
    %49 = vector.multi_reduction <add>, %48, %cst_27 [0] : vector<32x32xf32> to vector<32xf32>
    %50 = vector.shape_cast %49 : vector<32xf32> to vector<1x32xf32>
    %51 = vector.broadcast %50 : vector<1x32xf32> to vector<32x32xf32>
    %52 = vector.broadcast %44 : vector<32x1xf32> to vector<32x32xf32>
    %53 = arith.cmpf ogt, %51, %52 : vector<32x32xf32>
    %54 = vector.broadcast %50 : vector<1x32xf32> to vector<32x32xf32>
    %55 = vector.broadcast %44 : vector<32x1xf32> to vector<32x32xf32>
    %56 = arith.cmpf oeq, %54, %55 : vector<32x32xf32>
    %57 = arith.cmpi slt, %6, %5 : vector<32x32xi32>
    %58 = arith.andi %56, %57 : vector<32x32xi1>
    %59 = arith.ori %53, %58 : vector<32x32xi1>
    %cst_28 = arith.constant 0.000000e+00 : f32
    %60 = vector.broadcast %cst_28 : f32 to vector<32x32xf32>
    %61 = arith.select %59, %3, %60 : vector<32x32xi1>, vector<32x32xf32>
    %cst_29 = arith.constant dense<0.000000e+00> : vector<32xf32>
    %62 = vector.multi_reduction <add>, %61, %cst_29 [1] : vector<32x32xf32> to vector<32xf32>
    %63 = vector.shape_cast %62 : vector<32xf32> to vector<32x1xf32>
    %cst_30 = arith.constant dense<0.000000e+00> : vector<32x1xf32>
    %64 = tpu.matmul %3, %4, %cst_30 {dimension_numbers = #tpu.dot_dimension_numbers<[1], [0], [0], [1], [0, 0, 1, 1], [], []>} : vector<32x32xf32>, vector<32x1xf32>, vector<32x1xf32> -> vector<32x1xf32>
    %cst_31 = arith.constant 8.000000e-01 : f32
    %65 = vector.broadcast %cst_31 : f32 to vector<32x1xf32>
    %66 = arith.mulf %65, %64 : vector<32x1xf32>
    %67 = arith.cmpf olt, %63, %66 : vector<32x1xf32>
    %68 = arith.extui %67 : vector<32x1xi1> to vector<32x1xi32>
    %69 = arith.sitofp %68 : vector<32x1xi32> to vector<32x1xf32>
    %70 = arith.mulf %4, %69 : vector<32x1xf32>
    %cst_32 = arith.constant 0.000000e+00 : f32
    %71 = vector.broadcast %cst_32 : f32 to vector<32x1xf32>
    %72 = arith.cmpf ogt, %70, %71 : vector<32x1xf32>
    %cst_33 = arith.constant 0.000000e+00 : f32
    %73 = vector.broadcast %cst_33 : f32 to vector<32x1xf32>
    %74 = arith.select %72, %40, %73 : vector<32x1xi1>, vector<32x1xf32>
    %75 = vector.broadcast %74 : vector<32x1xf32> to vector<32x128xf32>
    %76 = arith.mulf %31, %75 : vector<32x128xf32>
    %cst_34 = arith.constant dense<0.000000e+00> : vector<2x1xf32>
    %77 = tpu.matmul %2, %70, %cst_34 {dimension_numbers = #tpu.dot_dimension_numbers<[1], [0], [0], [1], [0, 0, 1, 1], [], []>} : vector<2x32xf32>, vector<32x1xf32>, vector<2x1xf32> -> vector<2x1xf32>
    %cst_35 = arith.constant 1.000000e+00 : f32
    %78 = vector.broadcast %cst_35 : f32 to vector<2x1xf32>
    %79 = arith.maximumf %77, %78 : vector<2x1xf32>
    %80 = tpu.reciprocal %79 {approx = true} : vector<2x1xf32> -> vector<2x1xf32>
    %cst_36 = arith.constant dense<0.000000e+00> : vector<2x128xf32>
    %81 = tpu.matmul %2, %76, %cst_36 {dimension_numbers = #tpu.dot_dimension_numbers<[1], [0], [0], [1], [0, 0, 1, 1], [], []>} : vector<2x32xf32>, vector<32x128xf32>, vector<2x128xf32> -> vector<2x128xf32>
    %82 = vector.broadcast %80 : vector<2x1xf32> to vector<2x128xf32>
    %83 = arith.mulf %81, %82 : vector<2x128xf32>
    %84 = arith.addf %8, %83 : vector<2x128xf32>
    %85 = arith.truncf %70 : vector<32x1xf32> to vector<32x1xbf16>
    %cst_37 = arith.constant dense<0.000000e+00> : vector<32x1xf32>
    %86 = tpu.matmul %0, %85, %cst_37 {dimension_numbers = #tpu.dot_dimension_numbers<[1], [0], [0], [1], [0, 0, 1, 1], [], []>} : vector<32x32xbf16>, vector<32x1xbf16>, vector<32x1xf32> -> vector<32x1xf32>
    %cst_38 = arith.constant 1.000000e+00 : f32
    %87 = vector.broadcast %cst_38 : f32 to vector<32x1xf32>
    %88 = arith.maximumf %86, %87 : vector<32x1xf32>
    %89 = tpu.reciprocal %88 {approx = true} : vector<32x1xf32> -> vector<32x1xf32>
    %90 = arith.truncf %76 : vector<32x128xf32> to vector<32x128xbf16>
    %cst_39 = arith.constant dense<0.000000e+00> : vector<32x128xf32>
    %91 = tpu.matmul %0, %90, %cst_39 {dimension_numbers = #tpu.dot_dimension_numbers<[1], [0], [0], [1], [0, 0, 1, 1], [], []>} : vector<32x32xbf16>, vector<32x128xbf16>, vector<32x128xf32> -> vector<32x128xf32>
    %92 = vector.broadcast %89 : vector<32x1xf32> to vector<32x128xf32>
    %93 = arith.mulf %91, %92 : vector<32x128xf32>
    %94 = arith.truncf %93 : vector<32x128xf32> to vector<32x128xbf16>
    %c0_40 = arith.constant 0 : index
    %c0_41 = arith.constant 0 : index
    %95 = vector.load %arg9[%c0_40, %c0_41] : memref<128x128xf32, #tpu.memory_space<vmem>>, vector<128x128xf32>
    %96 = arith.truncf %95 : vector<128x128xf32> to vector<128x128xbf16>
    %cst_42 = arith.constant dense<0.000000e+00> : vector<32x128xf32>
    %97 = tpu.matmul %94, %96, %cst_42 {dimension_numbers = #tpu.dot_dimension_numbers<[1], [0], [0], [1], [0, 0, 1, 1], [], []>} : vector<32x128xbf16>, vector<128x128xbf16>, vector<32x128xf32> -> vector<32x128xf32>
    %c0_43 = arith.constant 0 : index
    %c0_44 = arith.constant 0 : index
    %98 = vector.load %arg10[%c0_43, %c0_44] : memref<1x128xf32, #tpu.memory_space<vmem>>, vector<1x128xf32>
    %99 = vector.broadcast %98 : vector<1x128xf32> to vector<32x128xf32>
    %100 = arith.addf %97, %99 : vector<32x128xf32>
    %101 = arith.truncf %76 : vector<32x128xf32> to vector<32x128xbf16>
    %c0_45 = arith.constant 0 : index
    %c0_46 = arith.constant 0 : index
    %102 = vector.load %arg11[%c0_45, %c0_46] : memref<128x128xf32, #tpu.memory_space<vmem>>, vector<128x128xf32>
    %103 = arith.truncf %102 : vector<128x128xf32> to vector<128x128xbf16>
    %cst_47 = arith.constant dense<0.000000e+00> : vector<32x128xf32>
    %104 = tpu.matmul %101, %103, %cst_47 {dimension_numbers = #tpu.dot_dimension_numbers<[1], [0], [0], [1], [0, 0, 1, 1], [], []>} : vector<32x128xbf16>, vector<128x128xbf16>, vector<32x128xf32> -> vector<32x128xf32>
    %105 = arith.addf %100, %104 : vector<32x128xf32>
    %cst_48 = arith.constant 0.000000e+00 : f32
    %106 = vector.broadcast %cst_48 : f32 to vector<32x128xf32>
    %107 = arith.maximumf %105, %106 : vector<32x128xf32>
    %c0_49 = arith.constant 0 : index
    %c0_50 = arith.constant 0 : index
    %108 = vector.load %arg12[%c0_49, %c0_50] : memref<128x1xf32, #tpu.memory_space<vmem>>, vector<128x1xf32>
    %109 = arith.mulf %108, %108 : vector<128x1xf32>
    %cst_51 = arith.constant dense<0.000000e+00> : vector<1xf32>
    %110 = vector.multi_reduction <add>, %109, %cst_51 [0] : vector<128x1xf32> to vector<1xf32>
    %111 = vector.shape_cast %110 : vector<1xf32> to vector<1x1xf32>
    %112 = math.rsqrt %111 : vector<1x1xf32>
    %cst_52 = arith.constant dense<0.000000e+00> : vector<32x1xf32>
    %113 = tpu.matmul %107, %108, %cst_52 {dimension_numbers = #tpu.dot_dimension_numbers<[1], [0], [0], [1], [0, 0, 1, 1], [], []>} : vector<32x128xf32>, vector<128x1xf32>, vector<32x1xf32> -> vector<32x1xf32>
    %114 = vector.broadcast %112 : vector<1x1xf32> to vector<32x1xf32>
    %115 = arith.mulf %113, %114 : vector<32x1xf32>
    %116 = math.tanh %115 : vector<32x1xf32>
    %cst_53 = arith.constant 0.000000e+00 : f32
    %117 = vector.broadcast %cst_53 : f32 to vector<32x1xf32>
    %118 = arith.cmpf ogt, %70, %117 : vector<32x1xf32>
    %cst_54 = arith.constant -1.000000e+30 : f32
    %119 = vector.broadcast %cst_54 : f32 to vector<32x1xf32>
    %120 = arith.select %118, %116, %119 : vector<32x1xi1>, vector<32x1xf32>
    %cst_55 = arith.constant 0.000000e+00 : f32
    %121 = vector.shape_cast %120 : vector<32x1xf32> to vector<32x1xf32>
    %122 = vector.broadcast %121 : vector<32x1xf32> to vector<32x32xf32>
    %123 = vector.broadcast %cst_55 : f32 to vector<32x32xf32>
    %124 = arith.select %7, %122, %123 : vector<32x32xi1>, vector<32x32xf32>
    %cst_56 = arith.constant dense<0.000000e+00> : vector<32xf32>
    %125 = vector.multi_reduction <add>, %124, %cst_56 [0] : vector<32x32xf32> to vector<32xf32>
    %126 = vector.shape_cast %125 : vector<32xf32> to vector<1x32xf32>
    %127 = vector.broadcast %126 : vector<1x32xf32> to vector<32x32xf32>
    %128 = vector.broadcast %120 : vector<32x1xf32> to vector<32x32xf32>
    %129 = arith.cmpf ogt, %127, %128 : vector<32x32xf32>
    %130 = vector.broadcast %126 : vector<1x32xf32> to vector<32x32xf32>
    %131 = vector.broadcast %120 : vector<32x1xf32> to vector<32x32xf32>
    %132 = arith.cmpf oeq, %130, %131 : vector<32x32xf32>
    %133 = arith.cmpi slt, %6, %5 : vector<32x32xi32>
    %134 = arith.andi %132, %133 : vector<32x32xi1>
    %135 = arith.ori %129, %134 : vector<32x32xi1>
    %cst_57 = arith.constant 0.000000e+00 : f32
    %136 = vector.broadcast %cst_57 : f32 to vector<32x32xf32>
    %137 = arith.select %135, %3, %136 : vector<32x32xi1>, vector<32x32xf32>
    %cst_58 = arith.constant dense<0.000000e+00> : vector<32xf32>
    %138 = vector.multi_reduction <add>, %137, %cst_58 [1] : vector<32x32xf32> to vector<32xf32>
    %139 = vector.shape_cast %138 : vector<32xf32> to vector<32x1xf32>
    %cst_59 = arith.constant dense<0.000000e+00> : vector<32x1xf32>
    %140 = tpu.matmul %3, %70, %cst_59 {dimension_numbers = #tpu.dot_dimension_numbers<[1], [0], [0], [1], [0, 0, 1, 1], [], []>} : vector<32x32xf32>, vector<32x1xf32>, vector<32x1xf32> -> vector<32x1xf32>
    %cst_60 = arith.constant 8.000000e-01 : f32
    %141 = vector.broadcast %cst_60 : f32 to vector<32x1xf32>
    %142 = arith.mulf %141, %140 : vector<32x1xf32>
    %143 = arith.cmpf olt, %139, %142 : vector<32x1xf32>
    %144 = arith.extui %143 : vector<32x1xi1> to vector<32x1xi32>
    %145 = arith.sitofp %144 : vector<32x1xi32> to vector<32x1xf32>
    %146 = arith.mulf %70, %145 : vector<32x1xf32>
    %cst_61 = arith.constant 0.000000e+00 : f32
    %147 = vector.broadcast %cst_61 : f32 to vector<32x1xf32>
    %148 = arith.cmpf ogt, %146, %147 : vector<32x1xf32>
    %cst_62 = arith.constant 0.000000e+00 : f32
    %149 = vector.broadcast %cst_62 : f32 to vector<32x1xf32>
    %150 = arith.select %148, %116, %149 : vector<32x1xi1>, vector<32x1xf32>
    %151 = vector.broadcast %150 : vector<32x1xf32> to vector<32x128xf32>
    %152 = arith.mulf %107, %151 : vector<32x128xf32>
    %cst_63 = arith.constant dense<0.000000e+00> : vector<2x1xf32>
    %153 = tpu.matmul %2, %146, %cst_63 {dimension_numbers = #tpu.dot_dimension_numbers<[1], [0], [0], [1], [0, 0, 1, 1], [], []>} : vector<2x32xf32>, vector<32x1xf32>, vector<2x1xf32> -> vector<2x1xf32>
    %cst_64 = arith.constant 1.000000e+00 : f32
    %154 = vector.broadcast %cst_64 : f32 to vector<2x1xf32>
    %155 = arith.maximumf %153, %154 : vector<2x1xf32>
    %156 = tpu.reciprocal %155 {approx = true} : vector<2x1xf32> -> vector<2x1xf32>
    %cst_65 = arith.constant dense<0.000000e+00> : vector<2x128xf32>
    %157 = tpu.matmul %2, %152, %cst_65 {dimension_numbers = #tpu.dot_dimension_numbers<[1], [0], [0], [1], [0, 0, 1, 1], [], []>} : vector<2x32xf32>, vector<32x128xf32>, vector<2x128xf32> -> vector<2x128xf32>
    %158 = vector.broadcast %156 : vector<2x1xf32> to vector<2x128xf32>
    %159 = arith.mulf %157, %158 : vector<2x128xf32>
    %160 = arith.addf %84, %159 : vector<2x128xf32>
    %161 = arith.truncf %146 : vector<32x1xf32> to vector<32x1xbf16>
    %cst_66 = arith.constant dense<0.000000e+00> : vector<32x1xf32>
    %162 = tpu.matmul %0, %161, %cst_66 {dimension_numbers = #tpu.dot_dimension_numbers<[1], [0], [0], [1], [0, 0, 1, 1], [], []>} : vector<32x32xbf16>, vector<32x1xbf16>, vector<32x1xf32> -> vector<32x1xf32>
    %cst_67 = arith.constant 1.000000e+00 : f32
    %163 = vector.broadcast %cst_67 : f32 to vector<32x1xf32>
    %164 = arith.maximumf %162, %163 : vector<32x1xf32>
    %165 = tpu.reciprocal %164 {approx = true} : vector<32x1xf32> -> vector<32x1xf32>
    %166 = arith.truncf %152 : vector<32x128xf32> to vector<32x128xbf16>
    %cst_68 = arith.constant dense<0.000000e+00> : vector<32x128xf32>
    %167 = tpu.matmul %0, %166, %cst_68 {dimension_numbers = #tpu.dot_dimension_numbers<[1], [0], [0], [1], [0, 0, 1, 1], [], []>} : vector<32x32xbf16>, vector<32x128xbf16>, vector<32x128xf32> -> vector<32x128xf32>
    %168 = vector.broadcast %165 : vector<32x1xf32> to vector<32x128xf32>
    %169 = arith.mulf %167, %168 : vector<32x128xf32>
    %170 = arith.truncf %169 : vector<32x128xf32> to vector<32x128xbf16>
    %c0_69 = arith.constant 0 : index
    %c0_70 = arith.constant 0 : index
    %171 = vector.load %arg13[%c0_69, %c0_70] : memref<128x128xf32, #tpu.memory_space<vmem>>, vector<128x128xf32>
    %172 = arith.truncf %171 : vector<128x128xf32> to vector<128x128xbf16>
    %cst_71 = arith.constant dense<0.000000e+00> : vector<32x128xf32>
    %173 = tpu.matmul %170, %172, %cst_71 {dimension_numbers = #tpu.dot_dimension_numbers<[1], [0], [0], [1], [0, 0, 1, 1], [], []>} : vector<32x128xbf16>, vector<128x128xbf16>, vector<32x128xf32> -> vector<32x128xf32>
    %c0_72 = arith.constant 0 : index
    %c0_73 = arith.constant 0 : index
    %174 = vector.load %arg14[%c0_72, %c0_73] : memref<1x128xf32, #tpu.memory_space<vmem>>, vector<1x128xf32>
    %175 = vector.broadcast %174 : vector<1x128xf32> to vector<32x128xf32>
    %176 = arith.addf %173, %175 : vector<32x128xf32>
    %177 = arith.truncf %152 : vector<32x128xf32> to vector<32x128xbf16>
    %c0_74 = arith.constant 0 : index
    %c0_75 = arith.constant 0 : index
    %178 = vector.load %arg15[%c0_74, %c0_75] : memref<128x128xf32, #tpu.memory_space<vmem>>, vector<128x128xf32>
    %179 = arith.truncf %178 : vector<128x128xf32> to vector<128x128xbf16>
    %cst_76 = arith.constant dense<0.000000e+00> : vector<32x128xf32>
    %180 = tpu.matmul %177, %179, %cst_76 {dimension_numbers = #tpu.dot_dimension_numbers<[1], [0], [0], [1], [0, 0, 1, 1], [], []>} : vector<32x128xbf16>, vector<128x128xbf16>, vector<32x128xf32> -> vector<32x128xf32>
    %181 = arith.addf %176, %180 : vector<32x128xf32>
    %cst_77 = arith.constant 0.000000e+00 : f32
    %182 = vector.broadcast %cst_77 : f32 to vector<32x128xf32>
    %183 = arith.maximumf %181, %182 : vector<32x128xf32>
    %c0_78 = arith.constant 0 : index
    %c0_79 = arith.constant 0 : index
    %184 = vector.load %arg16[%c0_78, %c0_79] : memref<128x1xf32, #tpu.memory_space<vmem>>, vector<128x1xf32>
    %185 = arith.mulf %184, %184 : vector<128x1xf32>
    %cst_80 = arith.constant dense<0.000000e+00> : vector<1xf32>
    %186 = vector.multi_reduction <add>, %185, %cst_80 [0] : vector<128x1xf32> to vector<1xf32>
    %187 = vector.shape_cast %186 : vector<1xf32> to vector<1x1xf32>
    %188 = math.rsqrt %187 : vector<1x1xf32>
    %cst_81 = arith.constant dense<0.000000e+00> : vector<32x1xf32>
    %189 = tpu.matmul %183, %184, %cst_81 {dimension_numbers = #tpu.dot_dimension_numbers<[1], [0], [0], [1], [0, 0, 1, 1], [], []>} : vector<32x128xf32>, vector<128x1xf32>, vector<32x1xf32> -> vector<32x1xf32>
    %190 = vector.broadcast %188 : vector<1x1xf32> to vector<32x1xf32>
    %191 = arith.mulf %189, %190 : vector<32x1xf32>
    %192 = math.tanh %191 : vector<32x1xf32>
    %cst_82 = arith.constant 0.000000e+00 : f32
    %193 = vector.broadcast %cst_82 : f32 to vector<32x1xf32>
    %194 = arith.cmpf ogt, %146, %193 : vector<32x1xf32>
    %cst_83 = arith.constant -1.000000e+30 : f32
    %195 = vector.broadcast %cst_83 : f32 to vector<32x1xf32>
    %196 = arith.select %194, %192, %195 : vector<32x1xi1>, vector<32x1xf32>
    %cst_84 = arith.constant 0.000000e+00 : f32
    %197 = vector.shape_cast %196 : vector<32x1xf32> to vector<32x1xf32>
    %198 = vector.broadcast %197 : vector<32x1xf32> to vector<32x32xf32>
    %199 = vector.broadcast %cst_84 : f32 to vector<32x32xf32>
    %200 = arith.select %7, %198, %199 : vector<32x32xi1>, vector<32x32xf32>
    %cst_85 = arith.constant dense<0.000000e+00> : vector<32xf32>
    %201 = vector.multi_reduction <add>, %200, %cst_85 [0] : vector<32x32xf32> to vector<32xf32>
    %202 = vector.shape_cast %201 : vector<32xf32> to vector<1x32xf32>
    %203 = vector.broadcast %202 : vector<1x32xf32> to vector<32x32xf32>
    %204 = vector.broadcast %196 : vector<32x1xf32> to vector<32x32xf32>
    %205 = arith.cmpf ogt, %203, %204 : vector<32x32xf32>
    %206 = vector.broadcast %202 : vector<1x32xf32> to vector<32x32xf32>
    %207 = vector.broadcast %196 : vector<32x1xf32> to vector<32x32xf32>
    %208 = arith.cmpf oeq, %206, %207 : vector<32x32xf32>
    %209 = arith.cmpi slt, %6, %5 : vector<32x32xi32>
    %210 = arith.andi %208, %209 : vector<32x32xi1>
    %211 = arith.ori %205, %210 : vector<32x32xi1>
    %cst_86 = arith.constant 0.000000e+00 : f32
    %212 = vector.broadcast %cst_86 : f32 to vector<32x32xf32>
    %213 = arith.select %211, %3, %212 : vector<32x32xi1>, vector<32x32xf32>
    %cst_87 = arith.constant dense<0.000000e+00> : vector<32xf32>
    %214 = vector.multi_reduction <add>, %213, %cst_87 [1] : vector<32x32xf32> to vector<32xf32>
    %215 = vector.shape_cast %214 : vector<32xf32> to vector<32x1xf32>
    %cst_88 = arith.constant dense<0.000000e+00> : vector<32x1xf32>
    %216 = tpu.matmul %3, %146, %cst_88 {dimension_numbers = #tpu.dot_dimension_numbers<[1], [0], [0], [1], [0, 0, 1, 1], [], []>} : vector<32x32xf32>, vector<32x1xf32>, vector<32x1xf32> -> vector<32x1xf32>
    %cst_89 = arith.constant 8.000000e-01 : f32
    %217 = vector.broadcast %cst_89 : f32 to vector<32x1xf32>
    %218 = arith.mulf %217, %216 : vector<32x1xf32>
    %219 = arith.cmpf olt, %215, %218 : vector<32x1xf32>
    %220 = arith.extui %219 : vector<32x1xi1> to vector<32x1xi32>
    %221 = arith.sitofp %220 : vector<32x1xi32> to vector<32x1xf32>
    %222 = arith.mulf %146, %221 : vector<32x1xf32>
    %cst_90 = arith.constant 0.000000e+00 : f32
    %223 = vector.broadcast %cst_90 : f32 to vector<32x1xf32>
    %224 = arith.cmpf ogt, %222, %223 : vector<32x1xf32>
    %cst_91 = arith.constant 0.000000e+00 : f32
    %225 = vector.broadcast %cst_91 : f32 to vector<32x1xf32>
    %226 = arith.select %224, %192, %225 : vector<32x1xi1>, vector<32x1xf32>
    %227 = vector.broadcast %226 : vector<32x1xf32> to vector<32x128xf32>
    %228 = arith.mulf %183, %227 : vector<32x128xf32>
    %cst_92 = arith.constant dense<0.000000e+00> : vector<2x1xf32>
    %229 = tpu.matmul %2, %222, %cst_92 {dimension_numbers = #tpu.dot_dimension_numbers<[1], [0], [0], [1], [0, 0, 1, 1], [], []>} : vector<2x32xf32>, vector<32x1xf32>, vector<2x1xf32> -> vector<2x1xf32>
    %cst_93 = arith.constant 1.000000e+00 : f32
    %230 = vector.broadcast %cst_93 : f32 to vector<2x1xf32>
    %231 = arith.maximumf %229, %230 : vector<2x1xf32>
    %232 = tpu.reciprocal %231 {approx = true} : vector<2x1xf32> -> vector<2x1xf32>
    %cst_94 = arith.constant dense<0.000000e+00> : vector<2x128xf32>
    %233 = tpu.matmul %2, %228, %cst_94 {dimension_numbers = #tpu.dot_dimension_numbers<[1], [0], [0], [1], [0, 0, 1, 1], [], []>} : vector<2x32xf32>, vector<32x128xf32>, vector<2x128xf32> -> vector<2x128xf32>
    %234 = vector.broadcast %232 : vector<2x1xf32> to vector<2x128xf32>
    %235 = arith.mulf %233, %234 : vector<2x128xf32>
    %236 = arith.addf %160, %235 : vector<2x128xf32>
    %c0_95 = arith.constant 0 : index
    %c0_96 = arith.constant 0 : index
    %237 = vector.load %arg17[%c0_95, %c0_96] : memref<128x128xf32, #tpu.memory_space<vmem>>, vector<128x128xf32>
    %cst_97 = arith.constant dense<0.000000e+00> : vector<2x128xf32>
    %238 = tpu.matmul %236, %237, %cst_97 {dimension_numbers = #tpu.dot_dimension_numbers<[1], [0], [0], [1], [0, 0, 1, 1], [], []>} : vector<2x128xf32>, vector<128x128xf32>, vector<2x128xf32> -> vector<2x128xf32>
    %c0_98 = arith.constant 0 : index
    %c0_99 = arith.constant 0 : index
    %239 = vector.load %arg18[%c0_98, %c0_99] : memref<1x128xf32, #tpu.memory_space<vmem>>, vector<1x128xf32>
    %240 = vector.broadcast %239 : vector<1x128xf32> to vector<2x128xf32>
    %241 = arith.addf %238, %240 : vector<2x128xf32>
    %cst_100 = arith.constant 0.000000e+00 : f32
    %242 = vector.broadcast %cst_100 : f32 to vector<2x128xf32>
    %243 = arith.maximumf %241, %242 : vector<2x128xf32>
    %c0_101 = arith.constant 0 : index
    %c0_102 = arith.constant 0 : index
    %244 = vector.load %arg19[%c0_101, %c0_102] : memref<128x64xf32, #tpu.memory_space<vmem>>, vector<128x64xf32>
    %cst_103 = arith.constant dense<0.000000e+00> : vector<2x64xf32>
    %245 = tpu.matmul %243, %244, %cst_103 {dimension_numbers = #tpu.dot_dimension_numbers<[1], [0], [0], [1], [0, 0, 1, 1], [], []>} : vector<2x128xf32>, vector<128x64xf32>, vector<2x64xf32> -> vector<2x64xf32>
    %c0_104 = arith.constant 0 : index
    %c0_105 = arith.constant 0 : index
    %246 = vector.load %arg20[%c0_104, %c0_105] : memref<1x64xf32, #tpu.memory_space<vmem>>, vector<1x64xf32>
    %247 = vector.broadcast %246 : vector<1x64xf32> to vector<2x64xf32>
    %248 = arith.addf %245, %247 : vector<2x64xf32>
    %cst_106 = arith.constant 0.000000e+00 : f32
    %249 = vector.broadcast %cst_106 : f32 to vector<2x64xf32>
    %250 = arith.maximumf %248, %249 : vector<2x64xf32>
    %c0_107 = arith.constant 0 : index
    %c0_108 = arith.constant 0 : index
    %251 = vector.load %arg21[%c0_107, %c0_108] : memref<64x1xf32, #tpu.memory_space<vmem>>, vector<64x1xf32>
    %cst_109 = arith.constant dense<0.000000e+00> : vector<2x1xf32>
    %252 = tpu.matmul %250, %251, %cst_109 {dimension_numbers = #tpu.dot_dimension_numbers<[1], [0], [0], [1], [0, 0, 1, 1], [], []>} : vector<2x64xf32>, vector<64x1xf32>, vector<2x1xf32> -> vector<2x1xf32>
    %c0_110 = arith.constant 0 : index
    %c0_111 = arith.constant 0 : index
    %253 = vector.load %arg22[%c0_110, %c0_111] : memref<1x1xf32, #tpu.memory_space<vmem>>, vector<1x1xf32>
    %254 = vector.broadcast %253 : vector<1x1xf32> to vector<2x1xf32>
    %255 = arith.addf %252, %254 : vector<2x1xf32>
    %256 = arith.negf %255 : vector<2x1xf32>
    %257 = math.exp %256 : vector<2x1xf32>
    %cst_112 = arith.constant 1.000000e+00 : f32
    %258 = vector.broadcast %cst_112 : f32 to vector<2x1xf32>
    %259 = arith.addf %258, %257 : vector<2x1xf32>
    %260 = arith.divf %258, %259 : vector<2x1xf32>
    %c0_113 = arith.constant 0 : index
    %c0_114 = arith.constant 0 : index
    %261 = vector.load %arg23[%c0_113, %c0_114] : memref<2x1xf32, #tpu.memory_space<vmem>>, vector<2x1xf32>
    tpu.vector_store %arg23[%c0_113, %c0_114], %260 {strides = array<i32>} : memref<2x1xf32, #tpu.memory_space<vmem>>, vector<2x1xf32>,
    return
  }
  func.func @transform_0(%arg0: i32) -> (i32, i32) {
    %c0_i32 = arith.constant 0 : i32
    %c0_i32_0 = arith.constant 0 : i32
    %c0_i32_1 = arith.constant 0 : i32
    return %c0_i32, %c0_i32_0 : i32, i32
  }
  func.func @transform_1(%arg0: i32) -> (i32, i32) {
    %c0_i32 = arith.constant 0 : i32
    %c0_i32_0 = arith.constant 0 : i32
    %c0_i32_1 = arith.constant 0 : i32
    return %c0_i32, %c0_i32_0 : i32, i32
  }
  func.func @transform_2(%arg0: i32) -> (i32, i32) {
    %c0_i32 = arith.constant 0 : i32
    %c0_i32_0 = arith.constant 0 : i32
    %c0_i32_1 = arith.constant 0 : i32
    return %c0_i32, %c0_i32_0 : i32, i32
  }
  func.func @transform_3(%arg0: i32) -> (i32, i32) {
    %c0_i32 = arith.constant 0 : i32
    %c0_i32_0 = arith.constant 0 : i32
    %c0_i32_1 = arith.constant 0 : i32
    return %c0_i32, %c0_i32_0 : i32, i32
  }
  func.func @transform_4(%arg0: i32) -> (i32, i32) {
    %c0_i32 = arith.constant 0 : i32
    %c0_i32_0 = arith.constant 0 : i32
    %c0_i32_1 = arith.constant 0 : i32
    return %c0_i32, %c0_i32_0 : i32, i32
  }
  func.func @transform_5(%arg0: i32) -> (i32, i32) {
    %c0_i32 = arith.constant 0 : i32
    %c0_i32_0 = arith.constant 0 : i32
    %c0_i32_1 = arith.constant 0 : i32
    return %c0_i32, %c0_i32_0 : i32, i32
  }
  func.func @transform_6(%arg0: i32) -> (i32, i32) {
    %c0_i32 = arith.constant 0 : i32
    %c0_i32_0 = arith.constant 0 : i32
    %c0_i32_1 = arith.constant 0 : i32
    return %c0_i32, %c0_i32_0 : i32, i32
  }
  func.func @transform_7(%arg0: i32) -> (i32, i32) {
    %c0_i32 = arith.constant 0 : i32
    %c0_i32_0 = arith.constant 0 : i32
    %c0_i32_1 = arith.constant 0 : i32
    return %c0_i32, %c0_i32_0 : i32, i32
  }
  func.func @transform_8(%arg0: i32) -> (i32, i32) {
    %c0_i32 = arith.constant 0 : i32
    %c0_i32_0 = arith.constant 0 : i32
    %c0_i32_1 = arith.constant 0 : i32
    return %c0_i32, %c0_i32_0 : i32, i32
  }
  func.func @transform_9(%arg0: i32) -> (i32, i32) {
    %c0_i32 = arith.constant 0 : i32
    %c0_i32_0 = arith.constant 0 : i32
    %c0_i32_1 = arith.constant 0 : i32
    return %c0_i32, %c0_i32_0 : i32, i32
  }
  func.func @transform_10(%arg0: i32) -> (i32, i32) {
    %c0_i32 = arith.constant 0 : i32
    %c0_i32_0 = arith.constant 0 : i32
    %c0_i32_1 = arith.constant 0 : i32
    return %c0_i32, %c0_i32_0 : i32, i32
  }
  func.func @transform_11(%arg0: i32) -> (i32, i32) {
    %c0_i32 = arith.constant 0 : i32
    %c0_i32_0 = arith.constant 0 : i32
    %c0_i32_1 = arith.constant 0 : i32
    return %c0_i32, %c0_i32_0 : i32, i32
  }
  func.func @transform_12(%arg0: i32) -> (i32, i32) {
    %c0_i32 = arith.constant 0 : i32
    %c0_i32_0 = arith.constant 0 : i32
    %c0_i32_1 = arith.constant 0 : i32
    return %c0_i32, %c0_i32_0 : i32, i32
  }
  func.func @transform_13(%arg0: i32) -> (i32, i32) {
    %c0_i32 = arith.constant 0 : i32
    %c0_i32_0 = arith.constant 0 : i32
    %c0_i32_1 = arith.constant 0 : i32
    return %c0_i32, %c0_i32_0 : i32, i32
  }
  func.func @transform_14(%arg0: i32) -> (i32, i32) {
    %c0_i32 = arith.constant 0 : i32
    %c0_i32_0 = arith.constant 0 : i32
    %c0_i32_1 = arith.constant 0 : i32
    return %c0_i32, %c0_i32_0 : i32, i32
  }
  func.func @transform_15(%arg0: i32) -> (i32, i32) {
    %c0_i32 = arith.constant 0 : i32
    %c0_i32_0 = arith.constant 0 : i32
    %c0_i32_1 = arith.constant 0 : i32
    return %c0_i32, %c0_i32_0 : i32, i32
  }
  func.func @transform_16(%arg0: i32) -> (i32, i32) {
    %c0_i32 = arith.constant 0 : i32
    %c0_i32_0 = arith.constant 0 : i32
    %c0_i32_1 = arith.constant 0 : i32
    return %c0_i32, %c0_i32_0 : i32, i32
  }
  func.func @transform_17(%arg0: i32) -> (i32, i32) {
    %c0_i32 = arith.constant 0 : i32
    %c0_i32_0 = arith.constant 0 : i32
    %c0_i32_1 = arith.constant 0 : i32
    return %c0_i32, %c0_i32_0 : i32, i32
  }
  func.func @transform_18(%arg0: i32) -> (i32, i32) {
    %c0_i32 = arith.constant 0 : i32
    %c0_i32_0 = arith.constant 0 : i32
    %c0_i32_1 = arith.constant 0 : i32
    return %c0_i32, %c0_i32_0 : i32, i32
  }
  func.func @transform_19(%arg0: i32) -> (i32, i32) {
    %c0_i32 = arith.constant 0 : i32
    %c0_i32_0 = arith.constant 0 : i32
    %c0_i32_1 = arith.constant 0 : i32
    return %c0_i32, %c0_i32_0 : i32, i32
  }
  func.func @transform_20(%arg0: i32) -> (i32, i32) {
    %c0_i32 = arith.constant 0 : i32
    %c0_i32_0 = arith.constant 0 : i32
    %c0_i32_1 = arith.constant 0 : i32
    return %c0_i32, %c0_i32_0 : i32, i32
  }
  func.func @transform_21(%arg0: i32) -> (i32, i32) {
    %c0_i32 = arith.constant 0 : i32
    %c0_i32_0 = arith.constant 0 : i32
    %c0_i32_1 = arith.constant 0 : i32
    return %c0_i32, %c0_i32_0 : i32, i32
  }
  func.func @transform_22(%arg0: i32) -> (i32, i32) {
    %c0_i32 = arith.constant 0 : i32
    %c0_i32_0 = arith.constant 0 : i32
    %c0_i32_1 = arith.constant 0 : i32
    return %c0_i32, %c0_i32_0 : i32, i32
  }
}

</mosaic_0001>

<llo_original>
// kernel: graphnet_forward.1
$region0: #{graphnet_forward.1}
  #allocation0 [shape = 'u32[]', space=smem, size = 0x4, offset = 0x4, fixed_abs, tag = 'smem constant byte address 0x4 - core index']
  #allocation1 [shape = 'u32[72,128]{1,0:T(1,128)}', space=vmem, size = 0x9000, scoped, tag = 'internal scratch']
  #allocation2 [shape = 'f32[1,1]{1,0:T(1,128)S(1)}', space=vmem, size = 0x200, scoped, tag = 'scoped memory for graphnet_forward.1']
  %s0 = inlined_call_operand.vmem [shape: bf16[32,32], index: 0, kind: input, shape index: {}]
  %s1 = inlined_call_operand.vmem [shape: f32[32,16], index: 1, kind: input, shape index: {}]
  %s2 = inlined_call_operand.vmem [shape: f32[2,32], index: 2, kind: input, shape index: {}]
  %s3 = inlined_call_operand.vmem [shape: f32[32,32], index: 3, kind: input, shape index: {}]
  %s4 = inlined_call_operand.vmem [shape: f32[16,128], index: 4, kind: input, shape index: {}]
  %s5 = inlined_call_operand.vmem [shape: f32[1,128], index: 5, kind: input, shape index: {}]
  %s6 = inlined_call_operand.vmem [shape: f32[16,128], index: 6, kind: input, shape index: {}]
  %s7 = inlined_call_operand.vmem [shape: f32[128,1], index: 7, kind: input, shape index: {}]
  %s8 = inlined_call_operand.vmem [shape: f32[128,128], index: 8, kind: input, shape index: {}]
  %s9 = inlined_call_operand.vmem [shape: f32[1,128], index: 9, kind: input, shape index: {}]
  %s10 = inlined_call_operand.vmem [shape: f32[128,128], index: 10, kind: input, shape index: {}]
  %s11 = inlined_call_operand.vmem [shape: f32[128,1], index: 11, kind: input, shape index: {}]
  %s12 = inlined_call_operand.vmem [shape: f32[128,128], index: 12, kind: input, shape index: {}]
  %s13 = inlined_call_operand.vmem [shape: f32[1,128], index: 13, kind: input, shape index: {}]
  %s14 = inlined_call_operand.vmem [shape: f32[128,128], index: 14, kind: input, shape index: {}]
  %s15 = inlined_call_operand.vmem [shape: f32[128,1], index: 15, kind: input, shape index: {}]
  %s16 = inlined_call_operand.vmem [shape: f32[128,128], index: 16, kind: input, shape index: {}]
  %s17 = inlined_call_operand.vmem [shape: f32[1,128], index: 17, kind: input, shape index: {}]
  %s18 = inlined_call_operand.vmem [shape: f32[128,64], index: 18, kind: input, shape index: {}]
  %s19 = inlined_call_operand.vmem [shape: f32[1,64], index: 19, kind: input, shape index: {}]
  %s20 = inlined_call_operand.vmem [shape: f32[64,1], index: 20, kind: input, shape index: {}]
  %s21 = inlined_call_operand.<no memory space> [shape: f32[1,1], index: 21, kind: input, shape index: {}]
  %s22 = inlined_call_operand.vmem [shape: f32[2,1], index: 22, kind: output, shape index: {}]
  %s23 = sld [smem:[#allocation0]]
  $region98: #{graphnet_forward.1} parent=0
    _
  %s25 = ssub.s32 1, %s23
  %s26 = scalar_select 0, %s25, %s23
  %v27 = vstv %s21
  %28 = vst [vmem:[#allocation2] sm:$0x1] %v27
  // Predicated region
  $region2: #{graphnet_forward.1} parent=0 // pred_check
    _
  $region3: #{graphnet_forward.1} parent=0 // pred_check_branch
    %30 = sbr.rel (0) target = $region5
  $region4: #{graphnet_forward.1} parent=0 // pred_region
    _
  $region5: #{graphnet_forward.1} parent=0 // pred_fallthru
    _
  // Predicated region
  $region6: #{graphnet_forward.1} parent=0 // pred_check
    _
  $region7: #{graphnet_forward.1} parent=0 // pred_check_branch
    %32 = sbr.rel (0) target = $region9
  $region8: #{graphnet_forward.1} parent=0 // pred_region
    _
  $region9: #{graphnet_forward.1} parent=0 // pred_fallthru
    _
  // Predicated region
  $region10: #{graphnet_forward.1} parent=0 // pred_check
    _
  $region11: #{graphnet_forward.1} parent=0 // pred_check_branch
    %34 = sbr.rel (0) target = $region13
  $region12: #{graphnet_forward.1} parent=0 // pred_region
    _
  $region13: #{graphnet_forward.1} parent=0 // pred_fallthru
    _
  // Predicated region
  $region14: #{graphnet_forward.1} parent=0 // pred_check
    _
  $region15: #{graphnet_forward.1} parent=0 // pred_check_branch
    %36 = sbr.rel (0) target = $region17
  $region16: #{graphnet_forward.1} parent=0 // pred_region
    _
  $region17: #{graphnet_forward.1} parent=0 // pred_fallthru
    _
  // Predicated region
  $region18: #{graphnet_forward.1} parent=0 // pred_check
    _
  $region19: #{graphnet_forward.1} parent=0 // pred_check_branch
    %38 = sbr.rel (0) target = $region21
  $region20: #{graphnet_forward.1} parent=0 // pred_region
    _
  $region21: #{graphnet_forward.1} parent=0 // pred_fallthru
    _
  // Predicated region
  $region22: #{graphnet_forward.1} parent=0 // pred_check
    _
  $region23: #{graphnet_forward.1} parent=0 // pred_check_branch
    %40 = sbr.rel (0) target = $region25
  $region24: #{graphnet_forward.1} parent=0 // pred_region
    _
  $region25: #{graphnet_forward.1} parent=0 // pred_fallthru
    _
  // Predicated region
  $region26: #{graphnet_forward.1} parent=0 // pred_check
    _
  $region27: #{graphnet_forward.1} parent=0 // pred_check_branch
    %42 = sbr.rel (0) target = $region29
  $region28: #{graphnet_forward.1} parent=0 // pred_region
    _
  $region29: #{graphnet_forward.1} parent=0 // pred_fallthru
    _
  // Predicated region
  $region30: #{graphnet_forward.1} parent=0 // pred_check
    _
  $region31: #{graphnet_forward.1} parent=0 // pred_check_branch
    %44 = sbr.rel (0) target = $region33
  $region32: #{graphnet_forward.1} parent=0 // pred_region
    _
  $region33: #{graphnet_forward.1} parent=0 // pred_fallthru
    _
  // Predicated region
  $region34: #{graphnet_forward.1} parent=0 // pred_check
    _
  $region35: #{graphnet_forward.1} parent=0 // pred_check_branch
    %46 = sbr.rel (0) target = $region37
  $region36: #{graphnet_forward.1} parent=0 // pred_region
    _
  $region37: #{graphnet_forward.1} parent=0 // pred_fallthru
    _
  // Predicated region
  $region38: #{graphnet_forward.1} parent=0 // pred_check
    _
  $region39: #{graphnet_forward.1} parent=0 // pred_check_branch
    %48 = sbr.rel (0) target = $region41
  $region40: #{graphnet_forward.1} parent=0 // pred_region
    _
  $region41: #{graphnet_forward.1} parent=0 // pred_fallthru
    _
  // Predicated region
  $region42: #{graphnet_forward.1} parent=0 // pred_check
    _
  $region43: #{graphnet_forward.1} parent=0 // pred_check_branch
    %50 = sbr.rel (0) target = $region45
  $region44: #{graphnet_forward.1} parent=0 // pred_region
    _
  $region45: #{graphnet_forward.1} parent=0 // pred_fallthru
    _
  // Predicated region
  $region46: #{graphnet_forward.1} parent=0 // pred_check
    _
  $region47: #{graphnet_forward.1} parent=0 // pred_check_branch
    %52 = sbr.rel (0) target = $region49
  $region48: #{graphnet_forward.1} parent=0 // pred_region
    _
  $region49: #{graphnet_forward.1} parent=0 // pred_fallthru
    _
  // Predicated region
  $region50: #{graphnet_forward.1} parent=0 // pred_check
    _
  $region51: #{graphnet_forward.1} parent=0 // pred_check_branch
    %54 = sbr.rel (0) target = $region53
  $region52: #{graphnet_forward.1} parent=0 // pred_region
    _
  $region53: #{graphnet_forward.1} parent=0 // pred_fallthru
    _
  // Predicated region
  $region54: #{graphnet_forward.1} parent=0 // pred_check
    _
  $region55: #{graphnet_forward.1} parent=0 // pred_check_branch
    %56 = sbr.rel (0) target = $region57
  $region56: #{graphnet_forward.1} parent=0 // pred_region
    _
  $region57: #{graphnet_forward.1} parent=0 // pred_fallthru
    _
  // Predicated region
  $region58: #{graphnet_forward.1} parent=0 // pred_check
    _
  $region59: #{graphnet_forward.1} parent=0 // pred_check_branch
    %58 = sbr.rel (0) target = $region61
  $region60: #{graphnet_forward.1} parent=0 // pred_region
    _
  $region61: #{graphnet_forward.1} parent=0 // pred_fallthru
    _
  // Predicated region
  $region62: #{graphnet_forward.1} parent=0 // pred_check
    _
  $region63: #{graphnet_forward.1} parent=0 // pred_check_branch
    %60 = sbr.rel (0) target = $region65
  $region64: #{graphnet_forward.1} parent=0 // pred_region
    _
  $region65: #{graphnet_forward.1} parent=0 // pred_fallthru
    _
  // Predicated region
  $region66: #{graphnet_forward.1} parent=0 // pred_check
    _
  $region67: #{graphnet_forward.1} parent=0 // pred_check_branch
    %62 = sbr.rel (0) target = $region69
  $region68: #{graphnet_forward.1} parent=0 // pred_region
    _
  $region69: #{graphnet_forward.1} parent=0 // pred_fallthru
    _
  // Predicated region
  $region70: #{graphnet_forward.1} parent=0 // pred_check
    _
  $region71: #{graphnet_forward.1} parent=0 // pred_check_branch
    %64 = sbr.rel (0) target = $region73
  $region72: #{graphnet_forward.1} parent=0 // pred_region
    _
  $region73: #{graphnet_forward.1} parent=0 // pred_fallthru
    _
  // Predicated region
  $region74: #{graphnet_forward.1} parent=0 // pred_check
    _
  $region75: #{graphnet_forward.1} parent=0 // pred_check_branch
    %66 = sbr.rel (0) target = $region77
  $region76: #{graphnet_forward.1} parent=0 // pred_region
    _
  $region77: #{graphnet_forward.1} parent=0 // pred_fallthru
    _
  // Predicated region
  $region78: #{graphnet_forward.1} parent=0 // pred_check
    _
  $region79: #{graphnet_forward.1} parent=0 // pred_check_branch
    %68 = sbr.rel (0) target = $region81
  $region80: #{graphnet_forward.1} parent=0 // pred_region
    _
  $region81: #{graphnet_forward.1} parent=0 // pred_fallthru
    _
  // Predicated region
  $region82: #{graphnet_forward.1} parent=0 // pred_check
    _
  $region83: #{graphnet_forward.1} parent=0 // pred_check_branch
    %70 = sbr.rel (0) target = $region85
  $region84: #{graphnet_forward.1} parent=0 // pred_region
    _
  $region85: #{graphnet_forward.1} parent=0 // pred_fallthru
    _
  // Predicated region
  $region86: #{graphnet_forward.1} parent=0 // pred_check
    _
  $region87: #{graphnet_forward.1} parent=0 // pred_check_branch
    %72 = sbr.rel (0) target = $region89
  $region88: #{graphnet_forward.1} parent=0 // pred_region
    _
  $region89: #{graphnet_forward.1} parent=0 // pred_fallthru
    _
  %v75 = vld [vmem:[%s0] sm:$0xf]
  %v76 = vld [vmem:[%s0 + $0x4] sm:$0xf]
  %v77 = vld [vmem:[%s0 + $0x8] sm:$0xf]
  %v78 = vld [vmem:[%s0 + $0xc] sm:$0xf]
  %v79 = vld [vmem:[%s1] sm:$0xff]
  %v80 = vld [vmem:[%s1 + $0x8] sm:$0xff]
  %v81 = vld [vmem:[%s1 + $0x10] sm:$0xff]
  %v82 = vld [vmem:[%s1 + $0x18] sm:$0xff]
  %v83 = vld [vmem:[%s2] sm:$0x3]
  %v84 = vld [vmem:[%s3] sm:$0xff]
  %v85 = vld [vmem:[%s3 + $0x8] sm:$0xff]
  %v86 = vld [vmem:[%s3 + $0x10] sm:$0xff]
  %v87 = vld [vmem:[%s3 + $0x18] sm:$0xff]
  %v88 = vlaneseq
  %v89 = vshrl.u32 %v88, 7
  %v90 = vadd.s32 %v89, 8
  %v91 = vadd.s32 %v89, 16
  %v92 = vadd.s32 %v89, 24
  %v93 = vlaneseq
  %v94 = vand.u32 %v93, 127
  %vm95 = vcmp.eq.s32.totalorder %v89, %v94
  %vm96 = vcmp.eq.s32.totalorder %v90, %v94
  %vm97 = vcmp.eq.s32.totalorder %v91, %v94
  %vm98 = vcmp.eq.s32.totalorder %v92, %v94
  %v103 = vunpack.c.l.b16 %v75
  %v104 = vunpack.c.l.b16 %v76
  %v105 = vunpack.c.l.b16 %v77
  %v106 = vunpack.c.l.b16 %v78
  %v107 = vpack.c.b16 %v104, %v103
  %v108 = vpack.c.b16 %v106, %v105
  %vm109 = vcmask 261120
  %v111 = vsel %vm109, %v107, 0
  %v114 = vsel %vm109, %v108, 0
  %116 = vmatpush.bf16.msra.mxu0 0
  %117 = vmatpush.bf16.msra.mxu0 0
  %118 = vmatpush.bf16.msra.mxu0 0
  %119 = vmatpush.bf16.msra.mxu0 0
  %120 = vmatpush.bf16.msra.mxu0 0
  %121 = vmatpush.bf16.msra.mxu0 0
  %122 = vmatpush.bf16.msra.mxu0 1065369472
  %123 = vmatpush.bf16.msra.mxu0 1065369472
  %124 = vmatmul.bf16.gmra.mxu0 %v111
  %v125 = vpop.f32.mrf.mxu0
  %v126 = vadd.f32 0.0, %v125
  %v127 = vpop.f32.mrf.mxu0
  %v128 = vadd.f32 0.0, %v127
  %129 = vmatmul.bf16.gmra.mxu0 %v114
  %v130 = vpop.f32.mrf.mxu0
  %v131 = vadd.f32 0.0, %v130
  %v132 = vpop.f32.mrf.mxu0
  %v133 = vadd.f32 0.0, %v132
  %134 = vdwg.mxu0
  %v135 = vmax.f32 %v126, 1.0
  %v136 = vmax.f32 %v128, 1.0
  %v137 = vmax.f32 %v131, 1.0
  %v138 = vmax.f32 %v133, 1.0
  %v139 = vrcp.pop %v135
  %v140 = vrcp.pop %v136
  %v141 = vrcp.pop %v137
  %v142 = vrcp.pop %v138
  %v143 = vpack.c.bf16 %v80, %v79
  %v144 = vpack.c.bf16 %v82, %v81
  %145 = vmatpush.bf16.msra.mxu0 0
  %146 = vmatpush.bf16.msra.mxu0 0
  %147 = vmatpush.bf16.msra.mxu0 0
  %148 = vmatpush.bf16.msra.mxu0 0
  %149 = vmatpush.bf16.msra.mxu0 0
  %150 = vmatpush.bf16.msra.mxu0 0
  %151 = vmatpush.bf16.msra.mxu0 %v144
  %152 = vmatpush.bf16.msra.mxu0 %v143
  %153 = vmatmul.bf16.gmra.mxu0 %v111
  %v154 = vpop.f32.mrf.mxu0
  %v155 = vadd.f32 0.0, %v154
  %v156 = vpop.f32.mrf.mxu0
  %v157 = vadd.f32 0.0, %v156
  %158 = vmatmul.bf16.gmra.mxu0 %v114
  %v159 = vpop.f32.mrf.mxu0
  %v160 = vadd.f32 0.0, %v159
  %v161 = vpop.f32.mrf.mxu0
  %v162 = vadd.f32 0.0, %v161
  %163 = vdwg.mxu0
  %165 = vset.pattern.permute.xlu0 0
  %166 = vperm.xlu0 %165, %v139
  %v167 = vpop.permute.xlu0 %166
  %170 = vset.pattern.permute.xlu0 0
  %171 = vperm.xlu0 %170, %v140
  %v172 = vpop.permute.xlu0 %171
  %175 = vset.pattern.permute.xlu0 0
  %176 = vperm.xlu0 %175, %v141
  %v177 = vpop.permute.xlu0 %176
  %180 = vset.pattern.permute.xlu0 0
  %181 = vperm.xlu0 %180, %v142
  %v182 = vpop.permute.xlu0 %181
  %v184 = vmul.f32 %v155, %v167
  %v185 = vmul.f32 %v157, %v172
  %v186 = vmul.f32 %v160, %v177
  %v187 = vmul.f32 %v162, %v182
  %v188 = vpack.c.bf16 %v185, %v184
  %v189 = vpack.c.bf16 %v187, %v186
  %v190 = vld [vmem:[%s4] sm:$0xff]
  %v191 = vld [vmem:[%s4 + $0x8] sm:$0xff]
  %v192 = vpack.c.bf16 %v191, %v190
  %v193 = vld [vmem:[%s5] sm:$0x1]
  %v195 = vperm.slane %v193, 0
  %vm197 = vcmask 130048
  %v199 = vsel %vm197, %v188, 0
  %v202 = vsel %vm197, %v189, 0
  %204 = vmatpush.bf16.msra.mxu0 0
  %205 = vmatpush.bf16.msra.mxu0 0
  %206 = vmatpush.bf16.msra.mxu0 0
  %207 = vmatpush.bf16.msra.mxu0 0
  %208 = vmatpush.bf16.msra.mxu0 0
  %209 = vmatpush.bf16.msra.mxu0 0
  %210 = vmatpush.bf16.msra.mxu0 0
  %211 = vmatpush.bf16.msra.mxu0 %v192
  %212 = vmatmul.bf16.gmra.mxu0 %v199
  %v213 = vpop.f32.mrf.mxu0
  %v214 = vadd.f32 %v195, %v213
  %v215 = vpop.f32.mrf.mxu0
  %v216 = vadd.f32 %v195, %v215
  %217 = vmatmul.bf16.gmra.mxu0 %v202
  %v218 = vpop.f32.mrf.mxu0
  %v219 = vadd.f32 %v195, %v218
  %v220 = vpop.f32.mrf.mxu0
  %v221 = vadd.f32 %v195, %v220
  %222 = vdwg.mxu0
  %v223 = vld [vmem:[%s6] sm:$0xff]
  %v224 = vld [vmem:[%s6 + $0x8] sm:$0xff]
  %v225 = vpack.c.bf16 %v224, %v223
  %v227 = vsel %vm197, %v143, 0
  %v230 = vsel %vm197, %v144, 0
  %232 = vmatpush.bf16.msra.mxu0 0
  %233 = vmatpush.bf16.msra.mxu0 0
  %234 = vmatpush.bf16.msra.mxu0 0
  %235 = vmatpush.bf16.msra.mxu0 0
  %236 = vmatpush.bf16.msra.mxu0 0
  %237 = vmatpush.bf16.msra.mxu0 0
  %238 = vmatpush.bf16.msra.mxu0 0
  %239 = vmatpush.bf16.msra.mxu0 %v225
  %240 = vmatmul.bf16.gmra.mxu0 %v227
  %v241 = vpop.f32.mrf.mxu0
  %v242 = vadd.f32 0.0, %v241
  %v243 = vpop.f32.mrf.mxu0
  %v244 = vadd.f32 0.0, %v243
  %245 = vmatmul.bf16.gmra.mxu0 %v230
  %v246 = vpop.f32.mrf.mxu0
  %v247 = vadd.f32 0.0, %v246
  %v248 = vpop.f32.mrf.mxu0
  %v249 = vadd.f32 0.0, %v248
  %250 = vdwg.mxu0
  %v251 = vadd.f32 %v214, %v242
  %v252 = vadd.f32 %v216, %v244
  %v253 = vadd.f32 %v219, %v247
  %v254 = vadd.f32 %v221, %v249
  %v255 = vmax.f32 %v251, 0.0
  %v256 = vmax.f32 %v252, 0.0
  %v257 = vmax.f32 %v253, 0.0
  %v258 = vmax.f32 %v254, 0.0
  %v259 = vld [vmem:[%s7] sm:$0xff]
  %v260 = vld [vmem:[%s7 + $0x8] sm:$0xff]
  %v261 = vld [vmem:[%s7 + $0x10] sm:$0xff]
  %v262 = vld [vmem:[%s7 + $0x18] sm:$0xff]
  %v263 = vld [vmem:[%s7 + $0x20] sm:$0xff]
  %v264 = vld [vmem:[%s7 + $0x28] sm:$0xff]
  %v265 = vld [vmem:[%s7 + $0x30] sm:$0xff]
  %v266 = vld [vmem:[%s7 + $0x38] sm:$0xff]
  %v267 = vld [vmem:[%s7 + $0x40] sm:$0xff]
  %v268 = vld [vmem:[%s7 + $0x48] sm:$0xff]
  %v269 = vld [vmem:[%s7 + $0x50] sm:$0xff]
  %v270 = vld [vmem:[%s7 + $0x58] sm:$0xff]
  %v271 = vld [vmem:[%s7 + $0x60] sm:$0xff]
  %v272 = vld [vmem:[%s7 + $0x68] sm:$0xff]
  %v273 = vld [vmem:[%s7 + $0x70] sm:$0xff]
  %v274 = vld [vmem:[%s7 + $0x78] sm:$0xff]
  %v275 = vmul.f32 %v259, %v259
  %v276 = vmul.f32 %v260, %v260
  %v277 = vmul.f32 %v261, %v261
  %v278 = vmul.f32 %v262, %v262
  %v279 = vmul.f32 %v263, %v263
  %v280 = vmul.f32 %v264, %v264
  %v281 = vmul.f32 %v265, %v265
  %v282 = vmul.f32 %v266, %v266
  %v283 = vmul.f32 %v267, %v267
  %v284 = vmul.f32 %v268, %v268
  %v285 = vmul.f32 %v269, %v269
  %v286 = vmul.f32 %v270, %v270
  %v287 = vmul.f32 %v271, %v271
  %v288 = vmul.f32 %v272, %v272
  %v289 = vmul.f32 %v273, %v273
  %v290 = vmul.f32 %v274, %v274
  %vm291 = vcmask 7168
  %v292 = vsel %vm291, %v275, 0.0
  %v293 = vsel %vm291, %v276, 0.0
  %v294 = vadd.f32 %v292, %v293
  %v295 = vsel %vm291, %v277, 0.0
  %v296 = vadd.f32 %v294, %v295
  %v297 = vsel %vm291, %v278, 0.0
  %v298 = vadd.f32 %v296, %v297
  %v299 = vsel %vm291, %v279, 0.0
  %v300 = vadd.f32 %v298, %v299
  %v301 = vsel %vm291, %v280, 0.0
  %v302 = vadd.f32 %v300, %v301
  %v303 = vsel %vm291, %v281, 0.0
  %v304 = vadd.f32 %v302, %v303
  %v305 = vsel %vm291, %v282, 0.0
  %v306 = vadd.f32 %v304, %v305
  %v307 = vsel %vm291, %v283, 0.0
  %v308 = vadd.f32 %v306, %v307
  %v309 = vsel %vm291, %v284, 0.0
  %v310 = vadd.f32 %v308, %v309
  %v311 = vsel %vm291, %v285, 0.0
  %v312 = vadd.f32 %v310, %v311
  %v313 = vsel %vm291, %v286, 0.0
  %v314 = vadd.f32 %v312, %v313
  %v315 = vsel %vm291, %v287, 0.0
  %v316 = vadd.f32 %v314, %v315
  %v317 = vsel %vm291, %v288, 0.0
  %v318 = vadd.f32 %v316, %v317
  %v319 = vsel %vm291, %v289, 0.0
  %v320 = vadd.f32 %v318, %v319
  %v321 = vsel %vm291, %v290, 0.0
  %v322 = vadd.f32 %v320, %v321
  %v323 = vrot.slane %v322, 4
  %v324 = vadd.f32 %v322, %v323
  %v325 = vrot.slane %v324, 2
  %v326 = vadd.f32 %v324, %v325
  %v327 = vrot.slane %v326, 1
  %v328 = vadd.f32 %v326, %v327
  %v329 = vrsqrt.pop %v328
  %v330 = vmul.f32 %v329, %v328
  %v331 = vmul.f32 %v330, %v329
  %v332 = vmul.f32 0.5, %v331
  %v333 = vsub.f32 1.5, %v332
  %v334 = vmul.f32 %v329, %v333
  %vm335 = vweird.f32 %v328
  %vm336 = vweird.f32 %v329
  %vm337 = vmor %vm335, %vm336
  %v338 = vsel %vm337, %v329, %v334
  %339 = vmatpush.msra.mxu0 %v274
  %340 = vmatpush.msra.mxu0 %v273
  %341 = vmatpush.msra.mxu0 %v272
  %342 = vmatpush.msra.mxu0 %v271
  %343 = vmatpush.msra.mxu0 %v270
  %344 = vmatpush.msra.mxu0 %v269
  %345 = vmatpush.msra.mxu0 %v268
  %346 = vmatpush.msra.mxu0 %v267
  %347 = vmatpush.msra.mxu0 %v266
  %348 = vmatpush.msra.mxu0 %v265
  %349 = vmatpush.msra.mxu0 %v264
  %350 = vmatpush.msra.mxu0 %v263
  %351 = vmatpush.msra.mxu0 %v262
  %352 = vmatpush.msra.mxu0 %v261
  %353 = vmatpush.msra.mxu0 %v260
  %354 = vmatpush.msra.mxu0 %v259
  %355 = vmatmul.f32.gmra.mxu0 %v255
  %v356 = vpop.f32.mrf.mxu0
  %v357 = vadd.f32 0.0, %v356
  %358 = vmatmul.f32.gmra.mxu0 %v256
  %v359 = vpop.f32.mrf.mxu0
  %v360 = vadd.f32 0.0, %v359
  %361 = vmatmul.f32.gmra.mxu0 %v257
  %v362 = vpop.f32.mrf.mxu0
  %v363 = vadd.f32 0.0, %v362
  %364 = vmatmul.f32.gmra.mxu0 %v258
  %v365 = vpop.f32.mrf.mxu0
  %v366 = vadd.f32 0.0, %v365
  %367 = vdwg.mxu0
  %v368 = vmul.f32 %v357, %v338
  %v369 = vmul.f32 %v360, %v338
  %v370 = vmul.f32 %v363, %v338
  %v371 = vmul.f32 %v366, %v338
  %v372 = vtanh.pop %v368
  %v373 = vtanh.pop %v369
  %v374 = vtanh.pop %v370
  %v375 = vtanh.pop %v371
  %vm376 = vcmp.gt.f32.partialorder 1.0, 0.0
  %v377 = vsel %vm376, %v372, -1e+30
  %v378 = vsel %vm376, %v373, -1e+30
  %v379 = vsel %vm376, %v374, -1e+30
  %v380 = vsel %vm376, %v375, -1e+30
  %382 = vset.pattern.permute.xlu0 0
  %383 = vperm.xlu0 %382, %v377
  %v384 = vpop.permute.xlu0 %383
  %387 = vset.pattern.permute.xlu0 0
  %388 = vperm.xlu0 %387, %v378
  %v389 = vpop.permute.xlu0 %388
  %392 = vset.pattern.permute.xlu0 0
  %393 = vperm.xlu0 %392, %v379
  %v394 = vpop.permute.xlu0 %393
  %397 = vset.pattern.permute.xlu0 0
  %398 = vperm.xlu0 %397, %v380
  %v399 = vpop.permute.xlu0 %398
  %v401 = vsel %vm95, %v384, 0.0
  %v402 = vsel %vm96, %v389, 0.0
  %v403 = vsel %vm97, %v394, 0.0
  %v404 = vsel %vm98, %v399, 0.0
  %v405 = vsel %vm109, %v401, 0.0
  %v406 = vsel %vm109, %v402, 0.0
  %v407 = vadd.f32 %v405, %v406
  %v408 = vsel %vm109, %v403, 0.0
  %v409 = vadd.f32 %v407, %v408
  %v410 = vsel %vm109, %v404, 0.0
  %v411 = vadd.f32 %v409, %v410
  %v412 = vrot.slane %v411, 4
  %v413 = vadd.f32 %v411, %v412
  %v414 = vrot.slane %v413, 2
  %v415 = vadd.f32 %v413, %v414
  %v416 = vrot.slane %v415, 1
  %v417 = vadd.f32 %v415, %v416
  %vm418 = vcmp.gt.f32.partialorder %v417, %v384
  %vm419 = vcmp.gt.f32.partialorder %v417, %v389
  %vm420 = vcmp.gt.f32.partialorder %v417, %v394
  %vm421 = vcmp.gt.f32.partialorder %v417, %v399
  %vm422 = vcmp.eq.f32.partialorder %v417, %v384
  %vm423 = vcmp.eq.f32.partialorder %v417, %v389
  %vm424 = vcmp.eq.f32.partialorder %v417, %v394
  %vm425 = vcmp.eq.f32.partialorder %v417, %v399
  %vm426 = vcmp.lt.s32.totalorder %v94, %v89
  %vm427 = vcmp.lt.s32.totalorder %v94, %v90
  %vm428 = vcmp.lt.s32.totalorder %v94, %v91
  %vm429 = vcmp.lt.s32.totalorder %v94, %v92
  %vm430 = vmand %vm422, %vm426
  %vm431 = vmand %vm423, %vm427
  %vm432 = vmand %vm424, %vm428
  %vm433 = vmand %vm425, %vm429
  %vm434 = vmor %vm418, %vm430
  %vm435 = vmor %vm419, %vm431
  %vm436 = vmor %vm420, %vm432
  %vm437 = vmor %vm421, %vm433
  %v438 = vsel %vm434, %v84, 0.0
  %v439 = vsel %vm435, %v85, 0.0
  %v440 = vsel %vm436, %v86, 0.0
  %v441 = vsel %vm437, %v87, 0.0
  %v442 = vsel %vm109, %v438, 0.0
  %443 = vadd.xlane.f32.xlu0 %v442
  %v444 = vpop.xlane.xlu0 %443
  %v445 = vsel %vm109, %v439, 0.0
  %446 = vadd.xlane.f32.xlu0 %v445
  %v447 = vpop.xlane.xlu0 %446
  %v448 = vsel %vm109, %v440, 0.0
  %449 = vadd.xlane.f32.xlu0 %v448
  %v450 = vpop.xlane.xlu0 %449
  %v451 = vsel %vm109, %v441, 0.0
  %452 = vadd.xlane.f32.xlu0 %v451
  %v453 = vpop.xlane.xlu0 %452
  %v455 = vsel %vm109, %v84, 0
  %v458 = vsel %vm109, %v85, 0
  %v461 = vsel %vm109, %v86, 0
  %v464 = vsel %vm109, %v87, 0
  %466 = vmatpush.msra.mxu0 0.0
  %467 = vmatpush.msra.mxu0 0.0
  %468 = vmatpush.msra.mxu0 0.0
  %469 = vmatpush.msra.mxu0 0.0
  %470 = vmatpush.msra.mxu0 0.0
  %471 = vmatpush.msra.mxu0 0.0
  %472 = vmatpush.msra.mxu0 0.0
  %473 = vmatpush.msra.mxu0 0.0
  %474 = vmatpush.msra.mxu0 0.0
  %475 = vmatpush.msra.mxu0 0.0
  %476 = vmatpush.msra.mxu0 0.0
  %477 = vmatpush.msra.mxu0 0.0
  %478 = vmatpush.msra.mxu0 1.0
  %479 = vmatpush.msra.mxu0 1.0
  %480 = vmatpush.msra.mxu0 1.0
  %481 = vmatpush.msra.mxu0 1.0
  %482 = vmatmul.f32.gmra.mxu0 %v455
  %v483 = vpop.f32.mrf.mxu0
  %v484 = vadd.f32 0.0, %v483
  %485 = vmatmul.f32.gmra.mxu0 %v458
  %v486 = vpop.f32.mrf.mxu0
  %v487 = vadd.f32 0.0, %v486
  %488 = vmatmul.f32.gmra.mxu0 %v461
  %v489 = vpop.f32.mrf.mxu0
  %v490 = vadd.f32 0.0, %v489
  %491 = vmatmul.f32.gmra.mxu0 %v464
  %v492 = vpop.f32.mrf.mxu0
  %v493 = vadd.f32 0.0, %v492
  %494 = vdwg.mxu0
  %v495 = vmul.f32 %v484, 0.8
  %v496 = vmul.f32 %v487, 0.8
  %v497 = vmul.f32 %v490, 0.8
  %v498 = vmul.f32 %v493, 0.8
  %vm499 = vcmp.lt.f32.partialorder %v444, %v495
  %vm500 = vcmp.lt.f32.partialorder %v447, %v496
  %vm501 = vcmp.lt.f32.partialorder %v450, %v497
  %vm502 = vcmp.lt.f32.partialorder %v453, %v498
  %v503 = vsel %vm499, 1, 0
  %v504 = vsel %vm500, 1, 0
  %v505 = vsel %vm501, 1, 0
  %v506 = vsel %vm502, 1, 0
  %v507 = vcvt.s32.f32 %v503
  %v508 = vcvt.s32.f32 %v504
  %v509 = vcvt.s32.f32 %v505
  %v510 = vcvt.s32.f32 %v506
  %vm511 = vcmp.gt.f32.partialorder %v507, 0.0
  %vm512 = vcmp.gt.f32.partialorder %v508, 0.0
  %vm513 = vcmp.gt.f32.partialorder %v509, 0.0
  %vm514 = vcmp.gt.f32.partialorder %v510, 0.0
  %v515 = vsel %vm511, %v372, 0.0
  %v516 = vsel %vm512, %v373, 0.0
  %v517 = vsel %vm513, %v374, 0.0
  %v518 = vsel %vm514, %v375, 0.0
  %520 = vset.pattern.permute.xlu0 0
  %521 = vperm.xlu0 %520, %v515
  %v522 = vpop.permute.xlu0 %521
  %525 = vset.pattern.permute.xlu0 0
  %526 = vperm.xlu0 %525, %v516
  %v527 = vpop.permute.xlu0 %526
  %530 = vset.pattern.permute.xlu0 0
  %531 = vperm.xlu0 %530, %v517
  %v532 = vpop.permute.xlu0 %531
  %535 = vset.pattern.permute.xlu0 0
  %536 = vperm.xlu0 %535, %v518
  %v537 = vpop.permute.xlu0 %536
  %v539 = vmul.f32 %v255, %v522
  %v540 = vmul.f32 %v256, %v527
  %v541 = vmul.f32 %v257, %v532
  %v542 = vmul.f32 %v258, %v537
  %v544 = vsel %vm109, %v83, 0
  %546 = vmatpush.msra.mxu0 0.0
  %547 = vmatpush.msra.mxu0 0.0
  %548 = vmatpush.msra.mxu0 0.0
  %549 = vmatpush.msra.mxu0 0.0
  %550 = vmatpush.msra.mxu0 0.0
  %551 = vmatpush.msra.mxu0 0.0
  %552 = vmatpush.msra.mxu0 0.0
  %553 = vmatpush.msra.mxu0 0.0
  %554 = vmatpush.msra.mxu0 0.0
  %555 = vmatpush.msra.mxu0 0.0
  %556 = vmatpush.msra.mxu0 0.0
  %557 = vmatpush.msra.mxu0 0.0
  %558 = vmatpush.msra.mxu0 %v510
  %559 = vmatpush.msra.mxu0 %v509
  %560 = vmatpush.msra.mxu0 %v508
  %561 = vmatpush.msra.mxu0 %v507
  %562 = vmatmul.f32.gmra.mxu0 %v544
  %v563 = vpop.f32.mrf.mxu0
  %v564 = vadd.f32 0.0, %v563
  %565 = vdwg.mxu0
  %v566 = vmax.f32 %v564, 1.0
  %v567 = vrcp.pop %v566
  %568 = vmatpush.msra.mxu0 0.0
  %569 = vmatpush.msra.mxu0 0.0
  %570 = vmatpush.msra.mxu0 0.0
  %571 = vmatpush.msra.mxu0 0.0
  %572 = vmatpush.msra.mxu0 0.0
  %573 = vmatpush.msra.mxu0 0.0
  %574 = vmatpush.msra.mxu0 0.0
  %575 = vmatpush.msra.mxu0 0.0
  %576 = vmatpush.msra.mxu0 0.0
  %577 = vmatpush.msra.mxu0 0.0
  %578 = vmatpush.msra.mxu0 0.0
  %579 = vmatpush.msra.mxu0 0.0
  %580 = vmatpush.msra.mxu0 %v542
  %581 = vmatpush.msra.mxu0 %v541
  %582 = vmatpush.msra.mxu0 %v540
  %583 = vmatpush.msra.mxu0 %v539
  %584 = vmatmul.f32.gmra.mxu0 %v544
  %v585 = vpop.f32.mrf.mxu0
  %v586 = vadd.f32 0.0, %v585
  %587 = vdwg.mxu0
  %589 = vset.pattern.permute.xlu0 0
  %590 = vperm.xlu0 %589, %v567
  %v591 = vpop.permute.xlu0 %590
  %v593 = vmul.f32 %v586, %v591
  %v594 = vadd.f32 %v593, 0.0
  %v595 = vpack.c.bf16 %v508, %v507
  %v596 = vpack.c.bf16 %v510, %v509
  %597 = vmatpush.bf16.msra.mxu0 0
  %598 = vmatpush.bf16.msra.mxu0 0
  %599 = vmatpush.bf16.msra.mxu0 0
  %600 = vmatpush.bf16.msra.mxu0 0
  %601 = vmatpush.bf16.msra.mxu0 0
  %602 = vmatpush.bf16.msra.mxu0 0
  %603 = vmatpush.bf16.msra.mxu0 %v596
  %604 = vmatpush.bf16.msra.mxu0 %v595
  %605 = vmatmul.bf16.gmra.mxu0 %v111
  %v606 = vpop.f32.mrf.mxu0
  %v607 = vadd.f32 0.0, %v606
  %v608 = vpop.f32.mrf.mxu0
  %v609 = vadd.f32 0.0, %v608
  %610 = vmatmul.bf16.gmra.mxu0 %v114
  %v611 = vpop.f32.mrf.mxu0
  %v612 = vadd.f32 0.0, %v611
  %v613 = vpop.f32.mrf.mxu0
  %v614 = vadd.f32 0.0, %v613
  %615 = vdwg.mxu0
  %v616 = vmax.f32 %v607, 1.0
  %v617 = vmax.f32 %v609, 1.0
  %v618 = vmax.f32 %v612, 1.0
  %v619 = vmax.f32 %v614, 1.0
  %v620 = vrcp.pop %v616
  %v621 = vrcp.pop %v617
  %v622 = vrcp.pop %v618
  %v623 = vrcp.pop %v619
  %v624 = vpack.c.bf16 %v540, %v539
  %v625 = vpack.c.bf16 %v542, %v541
  %626 = vmatpush.bf16.msra.mxu0 0
  %627 = vmatpush.bf16.msra.mxu0 0
  %628 = vmatpush.bf16.msra.mxu0 0
  %629 = vmatpush.bf16.msra.mxu0 0
  %630 = vmatpush.bf16.msra.mxu0 0
  %631 = vmatpush.bf16.msra.mxu0 0
  %632 = vmatpush.bf16.msra.mxu0 %v625
  %633 = vmatpush.bf16.msra.mxu0 %v624
  %634 = vmatmul.bf16.gmra.mxu0 %v111
  %v635 = vpop.f32.mrf.mxu0
  %v636 = vadd.f32 0.0, %v635
  %v637 = vpop.f32.mrf.mxu0
  %v638 = vadd.f32 0.0, %v637
  %639 = vmatmul.bf16.gmra.mxu0 %v114
  %v640 = vpop.f32.mrf.mxu0
  %v641 = vadd.f32 0.0, %v640
  %v642 = vpop.f32.mrf.mxu0
  %v643 = vadd.f32 0.0, %v642
  %644 = vdwg.mxu0
  %646 = vset.pattern.permute.xlu0 0
  %647 = vperm.xlu0 %646, %v620
  %v648 = vpop.permute.xlu0 %647
  %651 = vset.pattern.permute.xlu0 0
  %652 = vperm.xlu0 %651, %v621
  %v653 = vpop.permute.xlu0 %652
  %656 = vset.pattern.permute.xlu0 0
  %657 = vperm.xlu0 %656, %v622
  %v658 = vpop.permute.xlu0 %657
  %661 = vset.pattern.permute.xlu0 0
  %662 = vperm.xlu0 %661, %v623
  %v663 = vpop.permute.xlu0 %662
  %v665 = vmul.f32 %v636, %v648
  %v666 = vmul.f32 %v638, %v653
  %v667 = vmul.f32 %v641, %v658
  %v668 = vmul.f32 %v643, %v663
  %v669 = vpack.c.bf16 %v666, %v665
  %v670 = vpack.c.bf16 %v668, %v667
  %v671 = vld [vmem:[%s8] sm:$0xff]
  %v672 = vld [vmem:[%s8 + $0x8] sm:$0xff]
  %v673 = vld [vmem:[%s8 + $0x10] sm:$0xff]
  %v674 = vld [vmem:[%s8 + $0x18] sm:$0xff]
  %v675 = vld [vmem:[%s8 + $0x20] sm:$0xff]
  %v676 = vld [vmem:[%s8 + $0x28] sm:$0xff]
  %v677 = vld [vmem:[%s8 + $0x30] sm:$0xff]
  %v678 = vld [vmem:[%s8 + $0x38] sm:$0xff]
  %v679 = vld [vmem:[%s8 + $0x40] sm:$0xff]
  %v680 = vld [vmem:[%s8 + $0x48] sm:$0xff]
  %v681 = vld [vmem:[%s8 + $0x50] sm:$0xff]
  %v682 = vld [vmem:[%s8 + $0x58] sm:$0xff]
  %v683 = vld [vmem:[%s8 + $0x60] sm:$0xff]
  %v684 = vld [vmem:[%s8 + $0x68] sm:$0xff]
  %v685 = vld [vmem:[%s8 + $0x70] sm:$0xff]
  %v686 = vld [vmem:[%s8 + $0x78] sm:$0xff]
  %v687 = vpack.c.bf16 %v672, %v671
  %v688 = vpack.c.bf16 %v674, %v673
  %v689 = vpack.c.bf16 %v676, %v675
  %v690 = vpack.c.bf16 %v678, %v677
  %v691 = vpack.c.bf16 %v680, %v679
  %v692 = vpack.c.bf16 %v682, %v681
  %v693 = vpack.c.bf16 %v684, %v683
  %v694 = vpack.c.bf16 %v686, %v685
  %v695 = vld [vmem:[%s9] sm:$0x1]
  %v697 = vperm.slane %v695, 0
  %699 = vmatpush.bf16.msra.mxu0 %v694
  %700 = vmatpush.bf16.msra.mxu0 %v693
  %701 = vmatpush.bf16.msra.mxu0 %v692
  %702 = vmatpush.bf16.msra.mxu0 %v691
  %703 = vmatpush.bf16.msra.mxu0 %v690
  %704 = vmatpush.bf16.msra.mxu0 %v689
  %705 = vmatpush.bf16.msra.mxu0 %v688
  %706 = vmatpush.bf16.msra.mxu0 %v687
  %707 = vmatmul.bf16.gmra.mxu0 %v669
  %v708 = vpop.f32.mrf.mxu0
  %v709 = vadd.f32 %v697, %v708
  %v710 = vpop.f32.mrf.mxu0
  %v711 = vadd.f32 %v697, %v710
  %712 = vmatmul.bf16.gmra.mxu0 %v670
  %v713 = vpop.f32.mrf.mxu0
  %v714 = vadd.f32 %v697, %v713
  %v715 = vpop.f32.mrf.mxu0
  %v716 = vadd.f32 %v697, %v715
  %717 = vdwg.mxu0
  %v718 = vld [vmem:[%s10] sm:$0xff]
  %v719 = vld [vmem:[%s10 + $0x8] sm:$0xff]
  %v720 = vld [vmem:[%s10 + $0x10] sm:$0xff]
  %v721 = vld [vmem:[%s10 + $0x18] sm:$0xff]
  %v722 = vld [vmem:[%s10 + $0x20] sm:$0xff]
  %v723 = vld [vmem:[%s10 + $0x28] sm:$0xff]
  %v724 = vld [vmem:[%s10 + $0x30] sm:$0xff]
  %v725 = vld [vmem:[%s10 + $0x38] sm:$0xff]
  %v726 = vld [vmem:[%s10 + $0x40] sm:$0xff]
  %v727 = vld [vmem:[%s10 + $0x48] sm:$0xff]
  %v728 = vld [vmem:[%s10 + $0x50] sm:$0xff]
  %v729 = vld [vmem:[%s10 + $0x58] sm:$0xff]
  %v730 = vld [vmem:[%s10 + $0x60] sm:$0xff]
  %v731 = vld [vmem:[%s10 + $0x68] sm:$0xff]
  %v732 = vld [vmem:[%s10 + $0x70] sm:$0xff]
  %v733 = vld [vmem:[%s10 + $0x78] sm:$0xff]
  %v734 = vpack.c.bf16 %v719, %v718
  %v735 = vpack.c.bf16 %v721, %v720
  %v736 = vpack.c.bf16 %v723, %v722
  %v737 = vpack.c.bf16 %v725, %v724
  %v738 = vpack.c.bf16 %v727, %v726
  %v739 = vpack.c.bf16 %v729, %v728
  %v740 = vpack.c.bf16 %v731, %v730
  %v741 = vpack.c.bf16 %v733, %v732
  %742 = vmatpush.bf16.msra.mxu0 %v741
  %743 = vmatpush.bf16.msra.mxu0 %v740
  %744 = vmatpush.bf16.msra.mxu0 %v739
  %745 = vmatpush.bf16.msra.mxu0 %v738
  %746 = vmatpush.bf16.msra.mxu0 %v737
  %747 = vmatpush.bf16.msra.mxu0 %v736
  %748 = vmatpush.bf16.msra.mxu0 %v735
  %749 = vmatpush.bf16.msra.mxu0 %v734
  %750 = vmatmul.bf16.gmra.mxu0 %v624
  %v751 = vpop.f32.mrf.mxu0
  %v752 = vadd.f32 0.0, %v751
  %v753 = vpop.f32.mrf.mxu0
  %v754 = vadd.f32 0.0, %v753
  %755 = vmatmul.bf16.gmra.mxu0 %v625
  %v756 = vpop.f32.mrf.mxu0
  %v757 = vadd.f32 0.0, %v756
  %v758 = vpop.f32.mrf.mxu0
  %v759 = vadd.f32 0.0, %v758
  %760 = vdwg.mxu0
  %v761 = vadd.f32 %v709, %v752
  %v762 = vadd.f32 %v711, %v754
  %v763 = vadd.f32 %v714, %v757
  %v764 = vadd.f32 %v716, %v759
  %v765 = vmax.f32 %v761, 0.0
  %v766 = vmax.f32 %v762, 0.0
  %v767 = vmax.f32 %v763, 0.0
  %v768 = vmax.f32 %v764, 0.0
  %v769 = vld [vmem:[%s11] sm:$0xff]
  %v770 = vld [vmem:[%s11 + $0x8] sm:$0xff]
  %v771 = vld [vmem:[%s11 + $0x10] sm:$0xff]
  %v772 = vld [vmem:[%s11 + $0x18] sm:$0xff]
  %v773 = vld [vmem:[%s11 + $0x20] sm:$0xff]
  %v774 = vld [vmem:[%s11 + $0x28] sm:$0xff]
  %v775 = vld [vmem:[%s11 + $0x30] sm:$0xff]
  %v776 = vld [vmem:[%s11 + $0x38] sm:$0xff]
  %v777 = vld [vmem:[%s11 + $0x40] sm:$0xff]
  %v778 = vld [vmem:[%s11 + $0x48] sm:$0xff]
  %v779 = vld [vmem:[%s11 + $0x50] sm:$0xff]
  %v780 = vld [vmem:[%s11 + $0x58] sm:$0xff]
  %v781 = vld [vmem:[%s11 + $0x60] sm:$0xff]
  %v782 = vld [vmem:[%s11 + $0x68] sm:$0xff]
  %v783 = vld [vmem:[%s11 + $0x70] sm:$0xff]
  %v784 = vld [vmem:[%s11 + $0x78] sm:$0xff]
  %v785 = vmul.f32 %v769, %v769
  %v786 = vmul.f32 %v770, %v770
  %v787 = vmul.f32 %v771, %v771
  %v788 = vmul.f32 %v772, %v772
  %v789 = vmul.f32 %v773, %v773
  %v790 = vmul.f32 %v774, %v774
  %v791 = vmul.f32 %v775, %v775
  %v792 = vmul.f32 %v776, %v776
  %v793 = vmul.f32 %v777, %v777
  %v794 = vmul.f32 %v778, %v778
  %v795 = vmul.f32 %v779, %v779
  %v796 = vmul.f32 %v780, %v780
  %v797 = vmul.f32 %v781, %v781
  %v798 = vmul.f32 %v782, %v782
  %v799 = vmul.f32 %v783, %v783
  %v800 = vmul.f32 %v784, %v784
  %v801 = vsel %vm291, %v785, 0.0
  %v802 = vsel %vm291, %v786, 0.0
  %v803 = vadd.f32 %v801, %v802
  %v804 = vsel %vm291, %v787, 0.0
  %v805 = vadd.f32 %v803, %v804
  %v806 = vsel %vm291, %v788, 0.0
  %v807 = vadd.f32 %v805, %v806
  %v808 = vsel %vm291, %v789, 0.0
  %v809 = vadd.f32 %v807, %v808
  %v810 = vsel %vm291, %v790, 0.0
  %v811 = vadd.f32 %v809, %v810
  %v812 = vsel %vm291, %v791, 0.0
  %v813 = vadd.f32 %v811, %v812
  %v814 = vsel %vm291, %v792, 0.0
  %v815 = vadd.f32 %v813, %v814
  %v816 = vsel %vm291, %v793, 0.0
  %v817 = vadd.f32 %v815, %v816
  %v818 = vsel %vm291, %v794, 0.0
  %v819 = vadd.f32 %v817, %v818
  %v820 = vsel %vm291, %v795, 0.0
  %v821 = vadd.f32 %v819, %v820
  %v822 = vsel %vm291, %v796, 0.0
  %v823 = vadd.f32 %v821, %v822
  %v824 = vsel %vm291, %v797, 0.0
  %v825 = vadd.f32 %v823, %v824
  %v826 = vsel %vm291, %v798, 0.0
  %v827 = vadd.f32 %v825, %v826
  %v828 = vsel %vm291, %v799, 0.0
  %v829 = vadd.f32 %v827, %v828
  %v830 = vsel %vm291, %v800, 0.0
  %v831 = vadd.f32 %v829, %v830
  %v832 = vrot.slane %v831, 4
  %v833 = vadd.f32 %v831, %v832
  %v834 = vrot.slane %v833, 2
  %v835 = vadd.f32 %v833, %v834
  %v836 = vrot.slane %v835, 1
  %v837 = vadd.f32 %v835, %v836
  %v838 = vrsqrt.pop %v837
  %v839 = vmul.f32 %v838, %v837
  %v840 = vmul.f32 %v839, %v838
  %v841 = vmul.f32 0.5, %v840
  %v842 = vsub.f32 1.5, %v841
  %v843 = vmul.f32 %v838, %v842
  %vm844 = vweird.f32 %v837
  %vm845 = vweird.f32 %v838
  %vm846 = vmor %vm844, %vm845
  %v847 = vsel %vm846, %v838, %v843
  %848 = vmatpush.msra.mxu0 %v784
  %849 = vmatpush.msra.mxu0 %v783
  %850 = vmatpush.msra.mxu0 %v782
  %851 = vmatpush.msra.mxu0 %v781
  %852 = vmatpush.msra.mxu0 %v780
  %853 = vmatpush.msra.mxu0 %v779
  %854 = vmatpush.msra.mxu0 %v778
  %855 = vmatpush.msra.mxu0 %v777
  %856 = vmatpush.msra.mxu0 %v776
  %857 = vmatpush.msra.mxu0 %v775
  %858 = vmatpush.msra.mxu0 %v774
  %859 = vmatpush.msra.mxu0 %v773
  %860 = vmatpush.msra.mxu0 %v772
  %861 = vmatpush.msra.mxu0 %v771
  %862 = vmatpush.msra.mxu0 %v770
  %863 = vmatpush.msra.mxu0 %v769
  %864 = vmatmul.f32.gmra.mxu0 %v765
  %v865 = vpop.f32.mrf.mxu0
  %v866 = vadd.f32 0.0, %v865
  %867 = vmatmul.f32.gmra.mxu0 %v766
  %v868 = vpop.f32.mrf.mxu0
  %v869 = vadd.f32 0.0, %v868
  %870 = vmatmul.f32.gmra.mxu0 %v767
  %v871 = vpop.f32.mrf.mxu0
  %v872 = vadd.f32 0.0, %v871
  %873 = vmatmul.f32.gmra.mxu0 %v768
  %v874 = vpop.f32.mrf.mxu0
  %v875 = vadd.f32 0.0, %v874
  %876 = vdwg.mxu0
  %v877 = vmul.f32 %v866, %v847
  %v878 = vmul.f32 %v869, %v847
  %v879 = vmul.f32 %v872, %v847
  %v880 = vmul.f32 %v875, %v847
  %v881 = vtanh.pop %v877
  %v882 = vtanh.pop %v878
  %v883 = vtanh.pop %v879
  %v884 = vtanh.pop %v880
  %v885 = vsel %vm511, %v881, -1e+30
  %v886 = vsel %vm512, %v882, -1e+30
  %v887 = vsel %vm513, %v883, -1e+30
  %v888 = vsel %vm514, %v884, -1e+30
  %890 = vset.pattern.permute.xlu0 0
  %891 = vperm.xlu0 %890, %v885
  %v892 = vpop.permute.xlu0 %891
  %895 = vset.pattern.permute.xlu0 0
  %896 = vperm.xlu0 %895, %v886
  %v897 = vpop.permute.xlu0 %896
  %900 = vset.pattern.permute.xlu0 0
  %901 = vperm.xlu0 %900, %v887
  %v902 = vpop.permute.xlu0 %901
  %905 = vset.pattern.permute.xlu0 0
  %906 = vperm.xlu0 %905, %v888
  %v907 = vpop.permute.xlu0 %906
  %v909 = vsel %vm95, %v892, 0.0
  %v910 = vsel %vm96, %v897, 0.0
  %v911 = vsel %vm97, %v902, 0.0
  %v912 = vsel %vm98, %v907, 0.0
  %v913 = vsel %vm109, %v909, 0.0
  %v914 = vsel %vm109, %v910, 0.0
  %v915 = vadd.f32 %v913, %v914
  %v916 = vsel %vm109, %v911, 0.0
  %v917 = vadd.f32 %v915, %v916
  %v918 = vsel %vm109, %v912, 0.0
  %v919 = vadd.f32 %v917, %v918
  %v920 = vrot.slane %v919, 4
  %v921 = vadd.f32 %v919, %v920
  %v922 = vrot.slane %v921, 2
  %v923 = vadd.f32 %v921, %v922
  %v924 = vrot.slane %v923, 1
  %v925 = vadd.f32 %v923, %v924
  %vm926 = vcmp.gt.f32.partialorder %v925, %v892
  %vm927 = vcmp.gt.f32.partialorder %v925, %v897
  %vm928 = vcmp.gt.f32.partialorder %v925, %v902
  %vm929 = vcmp.gt.f32.partialorder %v925, %v907
  %vm930 = vcmp.eq.f32.partialorder %v925, %v892
  %vm931 = vcmp.eq.f32.partialorder %v925, %v897
  %vm932 = vcmp.eq.f32.partialorder %v925, %v902
  %vm933 = vcmp.eq.f32.partialorder %v925, %v907
  %vm934 = vmand %vm930, %vm426
  %vm935 = vmand %vm931, %vm427
  %vm936 = vmand %vm932, %vm428
  %vm937 = vmand %vm933, %vm429
  %vm938 = vmor %vm926, %vm934
  %vm939 = vmor %vm927, %vm935
  %vm940 = vmor %vm928, %vm936
  %vm941 = vmor %vm929, %vm937
  %v942 = vsel %vm938, %v84, 0.0
  %v943 = vsel %vm939, %v85, 0.0
  %v944 = vsel %vm940, %v86, 0.0
  %v945 = vsel %vm941, %v87, 0.0
  %v946 = vsel %vm109, %v942, 0.0
  %947 = vadd.xlane.f32.xlu0 %v946
  %v948 = vpop.xlane.xlu0 %947
  %v949 = vsel %vm109, %v943, 0.0
  %950 = vadd.xlane.f32.xlu0 %v949
  %v951 = vpop.xlane.xlu0 %950
  %v952 = vsel %vm109, %v944, 0.0
  %953 = vadd.xlane.f32.xlu0 %v952
  %v954 = vpop.xlane.xlu0 %953
  %v955 = vsel %vm109, %v945, 0.0
  %956 = vadd.xlane.f32.xlu0 %v955
  %v957 = vpop.xlane.xlu0 %956
  %958 = vmatpush.msra.mxu0 0.0
  %959 = vmatpush.msra.mxu0 0.0
  %960 = vmatpush.msra.mxu0 0.0
  %961 = vmatpush.msra.mxu0 0.0
  %962 = vmatpush.msra.mxu0 0.0
  %963 = vmatpush.msra.mxu0 0.0
  %964 = vmatpush.msra.mxu0 0.0
  %965 = vmatpush.msra.mxu0 0.0
  %966 = vmatpush.msra.mxu0 0.0
  %967 = vmatpush.msra.mxu0 0.0
  %968 = vmatpush.msra.mxu0 0.0
  %969 = vmatpush.msra.mxu0 0.0
  %970 = vmatpush.msra.mxu0 %v510
  %971 = vmatpush.msra.mxu0 %v509
  %972 = vmatpush.msra.mxu0 %v508
  %973 = vmatpush.msra.mxu0 %v507
  %974 = vmatmul.f32.gmra.mxu0 %v455
  %v975 = vpop.f32.mrf.mxu0
  %v976 = vadd.f32 0.0, %v975
  %977 = vmatmul.f32.gmra.mxu0 %v458
  %v978 = vpop.f32.mrf.mxu0
  %v979 = vadd.f32 0.0, %v978
  %980 = vmatmul.f32.gmra.mxu0 %v461
  %v981 = vpop.f32.mrf.mxu0
  %v982 = vadd.f32 0.0, %v981
  %983 = vmatmul.f32.gmra.mxu0 %v464
  %v984 = vpop.f32.mrf.mxu0
  %v985 = vadd.f32 0.0, %v984
  %986 = vdwg.mxu0
  %v987 = vmul.f32 %v976, 0.8
  %v988 = vmul.f32 %v979, 0.8
  %v989 = vmul.f32 %v982, 0.8
  %v990 = vmul.f32 %v985, 0.8
  %vm991 = vcmp.lt.f32.partialorder %v948, %v987
  %vm992 = vcmp.lt.f32.partialorder %v951, %v988
  %vm993 = vcmp.lt.f32.partialorder %v954, %v989
  %vm994 = vcmp.lt.f32.partialorder %v957, %v990
  %v995 = vsel %vm991, 1, 0
  %v996 = vsel %vm992, 1, 0
  %v997 = vsel %vm993, 1, 0
  %v998 = vsel %vm994, 1, 0
  %v999 = vcvt.s32.f32 %v995
  %v1000 = vcvt.s32.f32 %v996
  %v1001 = vcvt.s32.f32 %v997
  %v1002 = vcvt.s32.f32 %v998
  %v1003 = vmul.f32 %v507, %v999
  %v1004 = vmul.f32 %v508, %v1000
  %v1005 = vmul.f32 %v509, %v1001
  %v1006 = vmul.f32 %v510, %v1002
  %vm1007 = vcmp.gt.f32.partialorder %v1003, 0.0
  %vm1008 = vcmp.gt.f32.partialorder %v1004, 0.0
  %vm1009 = vcmp.gt.f32.partialorder %v1005, 0.0
  %vm1010 = vcmp.gt.f32.partialorder %v1006, 0.0
  %v1011 = vsel %vm1007, %v881, 0.0
  %v1012 = vsel %vm1008, %v882, 0.0
  %v1013 = vsel %vm1009, %v883, 0.0
  %v1014 = vsel %vm1010, %v884, 0.0
  %1016 = vset.pattern.permute.xlu0 0
  %1017 = vperm.xlu0 %1016, %v1011
  %v1018 = vpop.permute.xlu0 %1017
  %1021 = vset.pattern.permute.xlu0 0
  %1022 = vperm.xlu0 %1021, %v1012
  %v1023 = vpop.permute.xlu0 %1022
  %1026 = vset.pattern.permute.xlu0 0
  %1027 = vperm.xlu0 %1026, %v1013
  %v1028 = vpop.permute.xlu0 %1027
  %1031 = vset.pattern.permute.xlu0 0
  %1032 = vperm.xlu0 %1031, %v1014
  %v1033 = vpop.permute.xlu0 %1032
  %v1035 = vmul.f32 %v765, %v1018
  %v1036 = vmul.f32 %v766, %v1023
  %v1037 = vmul.f32 %v767, %v1028
  %v1038 = vmul.f32 %v768, %v1033
  %1039 = vmatpush.msra.mxu0 0.0
  %1040 = vmatpush.msra.mxu0 0.0
  %1041 = vmatpush.msra.mxu0 0.0
  %1042 = vmatpush.msra.mxu0 0.0
  %1043 = vmatpush.msra.mxu0 0.0
  %1044 = vmatpush.msra.mxu0 0.0
  %1045 = vmatpush.msra.mxu0 0.0
  %1046 = vmatpush.msra.mxu0 0.0
  %1047 = vmatpush.msra.mxu0 0.0
  %1048 = vmatpush.msra.mxu0 0.0
  %1049 = vmatpush.msra.mxu0 0.0
  %1050 = vmatpush.msra.mxu0 0.0
  %1051 = vmatpush.msra.mxu0 %v1006
  %1052 = vmatpush.msra.mxu0 %v1005
  %1053 = vmatpush.msra.mxu0 %v1004
  %1054 = vmatpush.msra.mxu0 %v1003
  %1055 = vmatmul.f32.gmra.mxu0 %v544
  %v1056 = vpop.f32.mrf.mxu0
  %v1057 = vadd.f32 0.0, %v1056
  %1058 = vdwg.mxu0
  %v1059 = vmax.f32 %v1057, 1.0
  %v1060 = vrcp.pop %v1059
  %1061 = vmatpush.msra.mxu0 0.0
  %1062 = vmatpush.msra.mxu0 0.0
  %1063 = vmatpush.msra.mxu0 0.0
  %1064 = vmatpush.msra.mxu0 0.0
  %1065 = vmatpush.msra.mxu0 0.0
  %1066 = vmatpush.msra.mxu0 0.0
  %1067 = vmatpush.msra.mxu0 0.0
  %1068 = vmatpush.msra.mxu0 0.0
  %1069 = vmatpush.msra.mxu0 0.0
  %1070 = vmatpush.msra.mxu0 0.0
  %1071 = vmatpush.msra.mxu0 0.0
  %1072 = vmatpush.msra.mxu0 0.0
  %1073 = vmatpush.msra.mxu0 %v1038
  %1074 = vmatpush.msra.mxu0 %v1037
  %1075 = vmatpush.msra.mxu0 %v1036
  %1076 = vmatpush.msra.mxu0 %v1035
  %1077 = vmatmul.f32.gmra.mxu0 %v544
  %v1078 = vpop.f32.mrf.mxu0
  %v1079 = vadd.f32 0.0, %v1078
  %1080 = vdwg.mxu0
  %1082 = vset.pattern.permute.xlu0 0
  %1083 = vperm.xlu0 %1082, %v1060
  %v1084 = vpop.permute.xlu0 %1083
  %v1086 = vmul.f32 %v1079, %v1084
  %v1087 = vadd.f32 %v594, %v1086
  %v1088 = vpack.c.bf16 %v1004, %v1003
  %v1089 = vpack.c.bf16 %v1006, %v1005
  %1090 = vmatpush.bf16.msra.mxu0 0
  %1091 = vmatpush.bf16.msra.mxu0 0
  %1092 = vmatpush.bf16.msra.mxu0 0
  %1093 = vmatpush.bf16.msra.mxu0 0
  %1094 = vmatpush.bf16.msra.mxu0 0
  %1095 = vmatpush.bf16.msra.mxu0 0
  %1096 = vmatpush.bf16.msra.mxu0 %v1089
  %1097 = vmatpush.bf16.msra.mxu0 %v1088
  %1098 = vmatmul.bf16.gmra.mxu0 %v111
  %v1099 = vpop.f32.mrf.mxu0
  %v1100 = vadd.f32 0.0, %v1099
  %v1101 = vpop.f32.mrf.mxu0
  %v1102 = vadd.f32 0.0, %v1101
  %1103 = vmatmul.bf16.gmra.mxu0 %v114
  %v1104 = vpop.f32.mrf.mxu0
  %v1105 = vadd.f32 0.0, %v1104
  %v1106 = vpop.f32.mrf.mxu0
  %v1107 = vadd.f32 0.0, %v1106
  %1108 = vdwg.mxu0
  %v1109 = vmax.f32 %v1100, 1.0
  %v1110 = vmax.f32 %v1102, 1.0
  %v1111 = vmax.f32 %v1105, 1.0
  %v1112 = vmax.f32 %v1107, 1.0
  %v1113 = vrcp.pop %v1109
  %v1114 = vrcp.pop %v1110
  %v1115 = vrcp.pop %v1111
  %v1116 = vrcp.pop %v1112
  %v1117 = vpack.c.bf16 %v1036, %v1035
  %v1118 = vpack.c.bf16 %v1038, %v1037
  %1119 = vmatpush.bf16.msra.mxu0 0
  %1120 = vmatpush.bf16.msra.mxu0 0
  %1121 = vmatpush.bf16.msra.mxu0 0
  %1122 = vmatpush.bf16.msra.mxu0 0
  %1123 = vmatpush.bf16.msra.mxu0 0
  %1124 = vmatpush.bf16.msra.mxu0 0
  %1125 = vmatpush.bf16.msra.mxu0 %v1118
  %1126 = vmatpush.bf16.msra.mxu0 %v1117
  %1127 = vmatmul.bf16.gmra.mxu0 %v111
  %v1128 = vpop.f32.mrf.mxu0
  %v1129 = vadd.f32 0.0, %v1128
  %v1130 = vpop.f32.mrf.mxu0
  %v1131 = vadd.f32 0.0, %v1130
  %1132 = vmatmul.bf16.gmra.mxu0 %v114
  %v1133 = vpop.f32.mrf.mxu0
  %v1134 = vadd.f32 0.0, %v1133
  %v1135 = vpop.f32.mrf.mxu0
  %v1136 = vadd.f32 0.0, %v1135
  %1137 = vdwg.mxu0
  %1139 = vset.pattern.permute.xlu0 0
  %1140 = vperm.xlu0 %1139, %v1113
  %v1141 = vpop.permute.xlu0 %1140
  %1144 = vset.pattern.permute.xlu0 0
  %1145 = vperm.xlu0 %1144, %v1114
  %v1146 = vpop.permute.xlu0 %1145
  %1149 = vset.pattern.permute.xlu0 0
  %1150 = vperm.xlu0 %1149, %v1115
  %v1151 = vpop.permute.xlu0 %1150
  %1154 = vset.pattern.permute.xlu0 0
  %1155 = vperm.xlu0 %1154, %v1116
  %v1156 = vpop.permute.xlu0 %1155
  %v1158 = vmul.f32 %v1129, %v1141
  %v1159 = vmul.f32 %v1131, %v1146
  %v1160 = vmul.f32 %v1134, %v1151
  %v1161 = vmul.f32 %v1136, %v1156
  %v1162 = vpack.c.bf16 %v1159, %v1158
  %v1163 = vpack.c.bf16 %v1161, %v1160
  %v1164 = vld [vmem:[%s12] sm:$0xff]
  %v1165 = vld [vmem:[%s12 + $0x8] sm:$0xff]
  %v1166 = vld [vmem:[%s12 + $0x10] sm:$0xff]
  %v1167 = vld [vmem:[%s12 + $0x18] sm:$0xff]
  %v1168 = vld [vmem:[%s12 + $0x20] sm:$0xff]
  %v1169 = vld [vmem:[%s12 + $0x28] sm:$0xff]
  %v1170 = vld [vmem:[%s12 + $0x30] sm:$0xff]
  %v1171 = vld [vmem:[%s12 + $0x38] sm:$0xff]
  %v1172 = vld [vmem:[%s12 + $0x40] sm:$0xff]
  %v1173 = vld [vmem:[%s12 + $0x48] sm:$0xff]
  %v1174 = vld [vmem:[%s12 + $0x50] sm:$0xff]
  %v1175 = vld [vmem:[%s12 + $0x58] sm:$0xff]
  %v1176 = vld [vmem:[%s12 + $0x60] sm:$0xff]
  %v1177 = vld [vmem:[%s12 + $0x68] sm:$0xff]
  %v1178 = vld [vmem:[%s12 + $0x70] sm:$0xff]
  %v1179 = vld [vmem:[%s12 + $0x78] sm:$0xff]
  %v1180 = vpack.c.bf16 %v1165, %v1164
  %v1181 = vpack.c.bf16 %v1167, %v1166
  %v1182 = vpack.c.bf16 %v1169, %v1168
  %v1183 = vpack.c.bf16 %v1171, %v1170
  %v1184 = vpack.c.bf16 %v1173, %v1172
  %v1185 = vpack.c.bf16 %v1175, %v1174
  %v1186 = vpack.c.bf16 %v1177, %v1176
  %v1187 = vpack.c.bf16 %v1179, %v1178
  %v1188 = vld [vmem:[%s13] sm:$0x1]
  %v1190 = vperm.slane %v1188, 0
  %1192 = vmatpush.bf16.msra.mxu0 %v1187
  %1193 = vmatpush.bf16.msra.mxu0 %v1186
  %1194 = vmatpush.bf16.msra.mxu0 %v1185
  %1195 = vmatpush.bf16.msra.mxu0 %v1184
  %1196 = vmatpush.bf16.msra.mxu0 %v1183
  %1197 = vmatpush.bf16.msra.mxu0 %v1182
  %1198 = vmatpush.bf16.msra.mxu0 %v1181
  %1199 = vmatpush.bf16.msra.mxu0 %v1180
  %1200 = vmatmul.bf16.gmra.mxu0 %v1162
  %v1201 = vpop.f32.mrf.mxu0
  %v1202 = vadd.f32 %v1190, %v1201
  %v1203 = vpop.f32.mrf.mxu0
  %v1204 = vadd.f32 %v1190, %v1203
  %1205 = vmatmul.bf16.gmra.mxu0 %v1163
  %v1206 = vpop.f32.mrf.mxu0
  %v1207 = vadd.f32 %v1190, %v1206
  %v1208 = vpop.f32.mrf.mxu0
  %v1209 = vadd.f32 %v1190, %v1208
  %1210 = vdwg.mxu0
  %v1211 = vld [vmem:[%s14] sm:$0xff]
  %v1212 = vld [vmem:[%s14 + $0x8] sm:$0xff]
  %v1213 = vld [vmem:[%s14 + $0x10] sm:$0xff]
  %v1214 = vld [vmem:[%s14 + $0x18] sm:$0xff]
  %v1215 = vld [vmem:[%s14 + $0x20] sm:$0xff]
  %v1216 = vld [vmem:[%s14 + $0x28] sm:$0xff]
  %v1217 = vld [vmem:[%s14 + $0x30] sm:$0xff]
  %v1218 = vld [vmem:[%s14 + $0x38] sm:$0xff]
  %v1219 = vld [vmem:[%s14 + $0x40] sm:$0xff]
  %v1220 = vld [vmem:[%s14 + $0x48] sm:$0xff]
  %v1221 = vld [vmem:[%s14 + $0x50] sm:$0xff]
  %v1222 = vld [vmem:[%s14 + $0x58] sm:$0xff]
  %v1223 = vld [vmem:[%s14 + $0x60] sm:$0xff]
  %v1224 = vld [vmem:[%s14 + $0x68] sm:$0xff]
  %v1225 = vld [vmem:[%s14 + $0x70] sm:$0xff]
  %v1226 = vld [vmem:[%s14 + $0x78] sm:$0xff]
  %v1227 = vpack.c.bf16 %v1212, %v1211
  %v1228 = vpack.c.bf16 %v1214, %v1213
  %v1229 = vpack.c.bf16 %v1216, %v1215
  %v1230 = vpack.c.bf16 %v1218, %v1217
  %v1231 = vpack.c.bf16 %v1220, %v1219
  %v1232 = vpack.c.bf16 %v1222, %v1221
  %v1233 = vpack.c.bf16 %v1224, %v1223
  %v1234 = vpack.c.bf16 %v1226, %v1225
  %1235 = vmatpush.bf16.msra.mxu0 %v1234
  %1236 = vmatpush.bf16.msra.mxu0 %v1233
  %1237 = vmatpush.bf16.msra.mxu0 %v1232
  %1238 = vmatpush.bf16.msra.mxu0 %v1231
  %1239 = vmatpush.bf16.msra.mxu0 %v1230
  %1240 = vmatpush.bf16.msra.mxu0 %v1229
  %1241 = vmatpush.bf16.msra.mxu0 %v1228
  %1242 = vmatpush.bf16.msra.mxu0 %v1227
  %1243 = vmatmul.bf16.gmra.mxu0 %v1117
  %v1244 = vpop.f32.mrf.mxu0
  %v1245 = vadd.f32 0.0, %v1244
  %v1246 = vpop.f32.mrf.mxu0
  %v1247 = vadd.f32 0.0, %v1246
  %1248 = vmatmul.bf16.gmra.mxu0 %v1118
  %v1249 = vpop.f32.mrf.mxu0
  %v1250 = vadd.f32 0.0, %v1249
  %v1251 = vpop.f32.mrf.mxu0
  %v1252 = vadd.f32 0.0, %v1251
  %1253 = vdwg.mxu0
  %v1254 = vadd.f32 %v1202, %v1245
  %v1255 = vadd.f32 %v1204, %v1247
  %v1256 = vadd.f32 %v1207, %v1250
  %v1257 = vadd.f32 %v1209, %v1252
  %v1258 = vmax.f32 %v1254, 0.0
  %v1259 = vmax.f32 %v1255, 0.0
  %v1260 = vmax.f32 %v1256, 0.0
  %v1261 = vmax.f32 %v1257, 0.0
  %v1262 = vld [vmem:[%s15] sm:$0xff]
  %v1263 = vld [vmem:[%s15 + $0x8] sm:$0xff]
  %v1264 = vld [vmem:[%s15 + $0x10] sm:$0xff]
  %v1265 = vld [vmem:[%s15 + $0x18] sm:$0xff]
  %v1266 = vld [vmem:[%s15 + $0x20] sm:$0xff]
  %v1267 = vld [vmem:[%s15 + $0x28] sm:$0xff]
  %v1268 = vld [vmem:[%s15 + $0x30] sm:$0xff]
  %v1269 = vld [vmem:[%s15 + $0x38] sm:$0xff]
  %v1270 = vld [vmem:[%s15 + $0x40] sm:$0xff]
  %v1271 = vld [vmem:[%s15 + $0x48] sm:$0xff]
  %v1272 = vld [vmem:[%s15 + $0x50] sm:$0xff]
  %v1273 = vld [vmem:[%s15 + $0x58] sm:$0xff]
  %v1274 = vld [vmem:[%s15 + $0x60] sm:$0xff]
  %v1275 = vld [vmem:[%s15 + $0x68] sm:$0xff]
  %v1276 = vld [vmem:[%s15 + $0x70] sm:$0xff]
  %v1277 = vld [vmem:[%s15 + $0x78] sm:$0xff]
  %v1278 = vmul.f32 %v1262, %v1262
  %v1279 = vmul.f32 %v1263, %v1263
  %v1280 = vmul.f32 %v1264, %v1264
  %v1281 = vmul.f32 %v1265, %v1265
  %v1282 = vmul.f32 %v1266, %v1266
  %v1283 = vmul.f32 %v1267, %v1267
  %v1284 = vmul.f32 %v1268, %v1268
  %v1285 = vmul.f32 %v1269, %v1269
  %v1286 = vmul.f32 %v1270, %v1270
  %v1287 = vmul.f32 %v1271, %v1271
  %v1288 = vmul.f32 %v1272, %v1272
  %v1289 = vmul.f32 %v1273, %v1273
  %v1290 = vmul.f32 %v1274, %v1274
  %v1291 = vmul.f32 %v1275, %v1275
  %v1292 = vmul.f32 %v1276, %v1276
  %v1293 = vmul.f32 %v1277, %v1277
  %v1294 = vsel %vm291, %v1278, 0.0
  %v1295 = vsel %vm291, %v1279, 0.0
  %v1296 = vadd.f32 %v1294, %v1295
  %v1297 = vsel %vm291, %v1280, 0.0
  %v1298 = vadd.f32 %v1296, %v1297
  %v1299 = vsel %vm291, %v1281, 0.0
  %v1300 = vadd.f32 %v1298, %v1299
  %v1301 = vsel %vm291, %v1282, 0.0
  %v1302 = vadd.f32 %v1300, %v1301
  %v1303 = vsel %vm291, %v1283, 0.0
  %v1304 = vadd.f32 %v1302, %v1303
  %v1305 = vsel %vm291, %v1284, 0.0
  %v1306 = vadd.f32 %v1304, %v1305
  %v1307 = vsel %vm291, %v1285, 0.0
  %v1308 = vadd.f32 %v1306, %v1307
  %v1309 = vsel %vm291, %v1286, 0.0
  %v1310 = vadd.f32 %v1308, %v1309
  %v1311 = vsel %vm291, %v1287, 0.0
  %v1312 = vadd.f32 %v1310, %v1311
  %v1313 = vsel %vm291, %v1288, 0.0
  %v1314 = vadd.f32 %v1312, %v1313
  %v1315 = vsel %vm291, %v1289, 0.0
  %v1316 = vadd.f32 %v1314, %v1315
  %v1317 = vsel %vm291, %v1290, 0.0
  %v1318 = vadd.f32 %v1316, %v1317
  %v1319 = vsel %vm291, %v1291, 0.0
  %v1320 = vadd.f32 %v1318, %v1319
  %v1321 = vsel %vm291, %v1292, 0.0
  %v1322 = vadd.f32 %v1320, %v1321
  %v1323 = vsel %vm291, %v1293, 0.0
  %v1324 = vadd.f32 %v1322, %v1323
  %v1325 = vrot.slane %v1324, 4
  %v1326 = vadd.f32 %v1324, %v1325
  %v1327 = vrot.slane %v1326, 2
  %v1328 = vadd.f32 %v1326, %v1327
  %v1329 = vrot.slane %v1328, 1
  %v1330 = vadd.f32 %v1328, %v1329
  %v1331 = vrsqrt.pop %v1330
  %v1332 = vmul.f32 %v1331, %v1330
  %v1333 = vmul.f32 %v1332, %v1331
  %v1334 = vmul.f32 0.5, %v1333
  %v1335 = vsub.f32 1.5, %v1334
  %v1336 = vmul.f32 %v1331, %v1335
  %vm1337 = vweird.f32 %v1330
  %vm1338 = vweird.f32 %v1331
  %vm1339 = vmor %vm1337, %vm1338
  %v1340 = vsel %vm1339, %v1331, %v1336
  %1341 = vmatpush.msra.mxu0 %v1277
  %1342 = vmatpush.msra.mxu0 %v1276
  %1343 = vmatpush.msra.mxu0 %v1275
  %1344 = vmatpush.msra.mxu0 %v1274
  %1345 = vmatpush.msra.mxu0 %v1273
  %1346 = vmatpush.msra.mxu0 %v1272
  %1347 = vmatpush.msra.mxu0 %v1271
  %1348 = vmatpush.msra.mxu0 %v1270
  %1349 = vmatpush.msra.mxu0 %v1269
  %1350 = vmatpush.msra.mxu0 %v1268
  %1351 = vmatpush.msra.mxu0 %v1267
  %1352 = vmatpush.msra.mxu0 %v1266
  %1353 = vmatpush.msra.mxu0 %v1265
  %1354 = vmatpush.msra.mxu0 %v1264
  %1355 = vmatpush.msra.mxu0 %v1263
  %1356 = vmatpush.msra.mxu0 %v1262
  %1357 = vmatmul.f32.gmra.mxu0 %v1258
  %v1358 = vpop.f32.mrf.mxu0
  %v1359 = vadd.f32 0.0, %v1358
  %1360 = vmatmul.f32.gmra.mxu0 %v1259
  %v1361 = vpop.f32.mrf.mxu0
  %v1362 = vadd.f32 0.0, %v1361
  %1363 = vmatmul.f32.gmra.mxu0 %v1260
  %v1364 = vpop.f32.mrf.mxu0
  %v1365 = vadd.f32 0.0, %v1364
  %1366 = vmatmul.f32.gmra.mxu0 %v1261
  %v1367 = vpop.f32.mrf.mxu0
  %v1368 = vadd.f32 0.0, %v1367
  %1369 = vdwg.mxu0
  %v1370 = vmul.f32 %v1359, %v1340
  %v1371 = vmul.f32 %v1362, %v1340
  %v1372 = vmul.f32 %v1365, %v1340
  %v1373 = vmul.f32 %v1368, %v1340
  %v1374 = vtanh.pop %v1370
  %v1375 = vtanh.pop %v1371
  %v1376 = vtanh.pop %v1372
  %v1377 = vtanh.pop %v1373
  %v1378 = vsel %vm1007, %v1374, -1e+30
  %v1379 = vsel %vm1008, %v1375, -1e+30
  %v1380 = vsel %vm1009, %v1376, -1e+30
  %v1381 = vsel %vm1010, %v1377, -1e+30
  %1383 = vset.pattern.permute.xlu0 0
  %1384 = vperm.xlu0 %1383, %v1378
  %v1385 = vpop.permute.xlu0 %1384
  %1388 = vset.pattern.permute.xlu0 0
  %1389 = vperm.xlu0 %1388, %v1379
  %v1390 = vpop.permute.xlu0 %1389
  %1393 = vset.pattern.permute.xlu0 0
  %1394 = vperm.xlu0 %1393, %v1380
  %v1395 = vpop.permute.xlu0 %1394
  %1398 = vset.pattern.permute.xlu0 0
  %1399 = vperm.xlu0 %1398, %v1381
  %v1400 = vpop.permute.xlu0 %1399
  %v1402 = vsel %vm95, %v1385, 0.0
  %v1403 = vsel %vm96, %v1390, 0.0
  %v1404 = vsel %vm97, %v1395, 0.0
  %v1405 = vsel %vm98, %v1400, 0.0
  %v1406 = vsel %vm109, %v1402, 0.0
  %v1407 = vsel %vm109, %v1403, 0.0
  %v1408 = vadd.f32 %v1406, %v1407
  %v1409 = vsel %vm109, %v1404, 0.0
  %v1410 = vadd.f32 %v1408, %v1409
  %v1411 = vsel %vm109, %v1405, 0.0
  %v1412 = vadd.f32 %v1410, %v1411
  %v1413 = vrot.slane %v1412, 4
  %v1414 = vadd.f32 %v1412, %v1413
  %v1415 = vrot.slane %v1414, 2
  %v1416 = vadd.f32 %v1414, %v1415
  %v1417 = vrot.slane %v1416, 1
  %v1418 = vadd.f32 %v1416, %v1417
  %vm1419 = vcmp.gt.f32.partialorder %v1418, %v1385
  %vm1420 = vcmp.gt.f32.partialorder %v1418, %v1390
  %vm1421 = vcmp.gt.f32.partialorder %v1418, %v1395
  %vm1422 = vcmp.gt.f32.partialorder %v1418, %v1400
  %vm1423 = vcmp.eq.f32.partialorder %v1418, %v1385
  %vm1424 = vcmp.eq.f32.partialorder %v1418, %v1390
  %vm1425 = vcmp.eq.f32.partialorder %v1418, %v1395
  %vm1426 = vcmp.eq.f32.partialorder %v1418, %v1400
  %vm1427 = vmand %vm1423, %vm426
  %vm1428 = vmand %vm1424, %vm427
  %vm1429 = vmand %vm1425, %vm428
  %vm1430 = vmand %vm1426, %vm429
  %vm1431 = vmor %vm1419, %vm1427
  %vm1432 = vmor %vm1420, %vm1428
  %vm1433 = vmor %vm1421, %vm1429
  %vm1434 = vmor %vm1422, %vm1430
  %v1435 = vsel %vm1431, %v84, 0.0
  %v1436 = vsel %vm1432, %v85, 0.0
  %v1437 = vsel %vm1433, %v86, 0.0
  %v1438 = vsel %vm1434, %v87, 0.0
  %v1439 = vsel %vm109, %v1435, 0.0
  %1440 = vadd.xlane.f32.xlu0 %v1439
  %v1441 = vpop.xlane.xlu0 %1440
  %v1442 = vsel %vm109, %v1436, 0.0
  %1443 = vadd.xlane.f32.xlu0 %v1442
  %v1444 = vpop.xlane.xlu0 %1443
  %v1445 = vsel %vm109, %v1437, 0.0
  %1446 = vadd.xlane.f32.xlu0 %v1445
  %v1447 = vpop.xlane.xlu0 %1446
  %v1448 = vsel %vm109, %v1438, 0.0
  %1449 = vadd.xlane.f32.xlu0 %v1448
  %v1450 = vpop.xlane.xlu0 %1449
  %1451 = vmatpush.msra.mxu0 0.0
  %1452 = vmatpush.msra.mxu0 0.0
  %1453 = vmatpush.msra.mxu0 0.0
  %1454 = vmatpush.msra.mxu0 0.0
  %1455 = vmatpush.msra.mxu0 0.0
  %1456 = vmatpush.msra.mxu0 0.0
  %1457 = vmatpush.msra.mxu0 0.0
  %1458 = vmatpush.msra.mxu0 0.0
  %1459 = vmatpush.msra.mxu0 0.0
  %1460 = vmatpush.msra.mxu0 0.0
  %1461 = vmatpush.msra.mxu0 0.0
  %1462 = vmatpush.msra.mxu0 0.0
  %1463 = vmatpush.msra.mxu0 %v1006
  %1464 = vmatpush.msra.mxu0 %v1005
  %1465 = vmatpush.msra.mxu0 %v1004
  %1466 = vmatpush.msra.mxu0 %v1003
  %1467 = vmatmul.f32.gmra.mxu0 %v455
  %v1468 = vpop.f32.mrf.mxu0
  %v1469 = vadd.f32 0.0, %v1468
  %1470 = vmatmul.f32.gmra.mxu0 %v458
  %v1471 = vpop.f32.mrf.mxu0
  %v1472 = vadd.f32 0.0, %v1471
  %1473 = vmatmul.f32.gmra.mxu0 %v461
  %v1474 = vpop.f32.mrf.mxu0
  %v1475 = vadd.f32 0.0, %v1474
  %1476 = vmatmul.f32.gmra.mxu0 %v464
  %v1477 = vpop.f32.mrf.mxu0
  %v1478 = vadd.f32 0.0, %v1477
  %1479 = vdwg.mxu0
  %v1480 = vmul.f32 %v1469, 0.8
  %v1481 = vmul.f32 %v1472, 0.8
  %v1482 = vmul.f32 %v1475, 0.8
  %v1483 = vmul.f32 %v1478, 0.8
  %vm1484 = vcmp.lt.f32.partialorder %v1441, %v1480
  %vm1485 = vcmp.lt.f32.partialorder %v1444, %v1481
  %vm1486 = vcmp.lt.f32.partialorder %v1447, %v1482
  %vm1487 = vcmp.lt.f32.partialorder %v1450, %v1483
  %v1488 = vsel %vm1484, 1, 0
  %v1489 = vsel %vm1485, 1, 0
  %v1490 = vsel %vm1486, 1, 0
  %v1491 = vsel %vm1487, 1, 0
  %v1492 = vcvt.s32.f32 %v1488
  %v1493 = vcvt.s32.f32 %v1489
  %v1494 = vcvt.s32.f32 %v1490
  %v1495 = vcvt.s32.f32 %v1491
  %v1496 = vmul.f32 %v1003, %v1492
  %v1497 = vmul.f32 %v1004, %v1493
  %v1498 = vmul.f32 %v1005, %v1494
  %v1499 = vmul.f32 %v1006, %v1495
  %vm1500 = vcmp.gt.f32.partialorder %v1496, 0.0
  %vm1501 = vcmp.gt.f32.partialorder %v1497, 0.0
  %vm1502 = vcmp.gt.f32.partialorder %v1498, 0.0
  %vm1503 = vcmp.gt.f32.partialorder %v1499, 0.0
  %v1504 = vsel %vm1500, %v1374, 0.0
  %v1505 = vsel %vm1501, %v1375, 0.0
  %v1506 = vsel %vm1502, %v1376, 0.0
  %v1507 = vsel %vm1503, %v1377, 0.0
  %1509 = vset.pattern.permute.xlu0 0
  %1510 = vperm.xlu0 %1509, %v1504
  %v1511 = vpop.permute.xlu0 %1510
  %1514 = vset.pattern.permute.xlu0 0
  %1515 = vperm.xlu0 %1514, %v1505
  %v1516 = vpop.permute.xlu0 %1515
  %1519 = vset.pattern.permute.xlu0 0
  %1520 = vperm.xlu0 %1519, %v1506
  %v1521 = vpop.permute.xlu0 %1520
  %1524 = vset.pattern.permute.xlu0 0
  %1525 = vperm.xlu0 %1524, %v1507
  %v1526 = vpop.permute.xlu0 %1525
  %v1528 = vmul.f32 %v1258, %v1511
  %v1529 = vmul.f32 %v1259, %v1516
  %v1530 = vmul.f32 %v1260, %v1521
  %v1531 = vmul.f32 %v1261, %v1526
  %1532 = vmatpush.msra.mxu0 0.0
  %1533 = vmatpush.msra.mxu0 0.0
  %1534 = vmatpush.msra.mxu0 0.0
  %1535 = vmatpush.msra.mxu0 0.0
  %1536 = vmatpush.msra.mxu0 0.0
  %1537 = vmatpush.msra.mxu0 0.0
  %1538 = vmatpush.msra.mxu0 0.0
  %1539 = vmatpush.msra.mxu0 0.0
  %1540 = vmatpush.msra.mxu0 0.0
  %1541 = vmatpush.msra.mxu0 0.0
  %1542 = vmatpush.msra.mxu0 0.0
  %1543 = vmatpush.msra.mxu0 0.0
  %1544 = vmatpush.msra.mxu0 %v1499
  %1545 = vmatpush.msra.mxu0 %v1498
  %1546 = vmatpush.msra.mxu0 %v1497
  %1547 = vmatpush.msra.mxu0 %v1496
  %1548 = vmatmul.f32.gmra.mxu0 %v544
  %v1549 = vpop.f32.mrf.mxu0
  %v1550 = vadd.f32 0.0, %v1549
  %1551 = vdwg.mxu0
  %v1552 = vmax.f32 %v1550, 1.0
  %v1553 = vrcp.pop %v1552
  %1554 = vmatpush.msra.mxu0 0.0
  %1555 = vmatpush.msra.mxu0 0.0
  %1556 = vmatpush.msra.mxu0 0.0
  %1557 = vmatpush.msra.mxu0 0.0
  %1558 = vmatpush.msra.mxu0 0.0
  %1559 = vmatpush.msra.mxu0 0.0
  %1560 = vmatpush.msra.mxu0 0.0
  %1561 = vmatpush.msra.mxu0 0.0
  %1562 = vmatpush.msra.mxu0 0.0
  %1563 = vmatpush.msra.mxu0 0.0
  %1564 = vmatpush.msra.mxu0 0.0
  %1565 = vmatpush.msra.mxu0 0.0
  %1566 = vmatpush.msra.mxu0 %v1531
  %1567 = vmatpush.msra.mxu0 %v1530
  %1568 = vmatpush.msra.mxu0 %v1529
  %1569 = vmatpush.msra.mxu0 %v1528
  %1570 = vmatmul.f32.gmra.mxu0 %v544
  %v1571 = vpop.f32.mrf.mxu0
  %v1572 = vadd.f32 0.0, %v1571
  %1573 = vdwg.mxu0
  %1575 = vset.pattern.permute.xlu0 0
  %1576 = vperm.xlu0 %1575, %v1553
  %v1577 = vpop.permute.xlu0 %1576
  %v1579 = vmul.f32 %v1572, %v1577
  %v1580 = vadd.f32 %v1087, %v1579
  %v1581 = vld [vmem:[%s16] sm:$0xff]
  %v1582 = vld [vmem:[%s16 + $0x8] sm:$0xff]
  %v1583 = vld [vmem:[%s16 + $0x10] sm:$0xff]
  %v1584 = vld [vmem:[%s16 + $0x18] sm:$0xff]
  %v1585 = vld [vmem:[%s16 + $0x20] sm:$0xff]
  %v1586 = vld [vmem:[%s16 + $0x28] sm:$0xff]
  %v1587 = vld [vmem:[%s16 + $0x30] sm:$0xff]
  %v1588 = vld [vmem:[%s16 + $0x38] sm:$0xff]
  %v1589 = vld [vmem:[%s16 + $0x40] sm:$0xff]
  %v1590 = vld [vmem:[%s16 + $0x48] sm:$0xff]
  %v1591 = vld [vmem:[%s16 + $0x50] sm:$0xff]
  %v1592 = vld [vmem:[%s16 + $0x58] sm:$0xff]
  %v1593 = vld [vmem:[%s16 + $0x60] sm:$0xff]
  %v1594 = vld [vmem:[%s16 + $0x68] sm:$0xff]
  %v1595 = vld [vmem:[%s16 + $0x70] sm:$0xff]
  %v1596 = vld [vmem:[%s16 + $0x78] sm:$0xff]
  %v1597 = vld [vmem:[%s17] sm:$0x1]
  %v1599 = vperm.slane %v1597, 0
  %1601 = vmatpush.msra.mxu0 %v1596
  %1602 = vmatpush.msra.mxu0 %v1595
  %1603 = vmatpush.msra.mxu0 %v1594
  %1604 = vmatpush.msra.mxu0 %v1593
  %1605 = vmatpush.msra.mxu0 %v1592
  %1606 = vmatpush.msra.mxu0 %v1591
  %1607 = vmatpush.msra.mxu0 %v1590
  %1608 = vmatpush.msra.mxu0 %v1589
  %1609 = vmatpush.msra.mxu0 %v1588
  %1610 = vmatpush.msra.mxu0 %v1587
  %1611 = vmatpush.msra.mxu0 %v1586
  %1612 = vmatpush.msra.mxu0 %v1585
  %1613 = vmatpush.msra.mxu0 %v1584
  %1614 = vmatpush.msra.mxu0 %v1583
  %1615 = vmatpush.msra.mxu0 %v1582
  %1616 = vmatpush.msra.mxu0 %v1581
  %1617 = vmatmul.f32.gmra.mxu0 %v1580
  %v1618 = vpop.f32.mrf.mxu0
  %v1619 = vadd.f32 %v1599, %v1618
  %1620 = vdwg.mxu0
  %v1621 = vmax.f32 %v1619, 0.0
  %v1622 = vld [vmem:[%s18] sm:$0xff]
  %v1623 = vld [vmem:[%s18 + $0x8] sm:$0xff]
  %v1624 = vld [vmem:[%s18 + $0x10] sm:$0xff]
  %v1625 = vld [vmem:[%s18 + $0x18] sm:$0xff]
  %v1626 = vld [vmem:[%s18 + $0x20] sm:$0xff]
  %v1627 = vld [vmem:[%s18 + $0x28] sm:$0xff]
  %v1628 = vld [vmem:[%s18 + $0x30] sm:$0xff]
  %v1629 = vld [vmem:[%s18 + $0x38] sm:$0xff]
  %v1630 = vld [vmem:[%s18 + $0x40] sm:$0xff]
  %v1631 = vld [vmem:[%s18 + $0x48] sm:$0xff]
  %v1632 = vld [vmem:[%s18 + $0x50] sm:$0xff]
  %v1633 = vld [vmem:[%s18 + $0x58] sm:$0xff]
  %v1634 = vld [vmem:[%s18 + $0x60] sm:$0xff]
  %v1635 = vld [vmem:[%s18 + $0x68] sm:$0xff]
  %v1636 = vld [vmem:[%s18 + $0x70] sm:$0xff]
  %v1637 = vld [vmem:[%s18 + $0x78] sm:$0xff]
  %v1638 = vld [vmem:[%s19] sm:$0x1]
  %v1640 = vperm.slane %v1638, 0
  %1642 = vmatpush.msra.mxu0 %v1637
  %1643 = vmatpush.msra.mxu0 %v1636
  %1644 = vmatpush.msra.mxu0 %v1635
  %1645 = vmatpush.msra.mxu0 %v1634
  %1646 = vmatpush.msra.mxu0 %v1633
  %1647 = vmatpush.msra.mxu0 %v1632
  %1648 = vmatpush.msra.mxu0 %v1631
  %1649 = vmatpush.msra.mxu0 %v1630
  %1650 = vmatpush.msra.mxu0 %v1629
  %1651 = vmatpush.msra.mxu0 %v1628
  %1652 = vmatpush.msra.mxu0 %v1627
  %1653 = vmatpush.msra.mxu0 %v1626
  %1654 = vmatpush.msra.mxu0 %v1625
  %1655 = vmatpush.msra.mxu0 %v1624
  %1656 = vmatpush.msra.mxu0 %v1623
  %1657 = vmatpush.msra.mxu0 %v1622
  %1658 = vmatmul.f32.gmra.mxu0 %v1621
  %v1659 = vpop.f32.mrf.mxu0
  %v1660 = vadd.f32 %v1640, %v1659
  %1661 = vdwg.mxu0
  %v1662 = vmax.f32 %v1660, 0.0
  %v1663 = vld [vmem:[%s20] sm:$0xff]
  %v1664 = vld [vmem:[%s20 + $0x8] sm:$0xff]
  %v1665 = vld [vmem:[%s20 + $0x10] sm:$0xff]
  %v1666 = vld [vmem:[%s20 + $0x18] sm:$0xff]
  %v1667 = vld [vmem:[%s20 + $0x20] sm:$0xff]
  %v1668 = vld [vmem:[%s20 + $0x28] sm:$0xff]
  %v1669 = vld [vmem:[%s20 + $0x30] sm:$0xff]
  %v1670 = vld [vmem:[%s20 + $0x38] sm:$0xff]
  %v1671 = vld [vmem:[#allocation2] sm:$0x1]
  %v1673 = vperm.slane %v1671, 0
  %vm1675 = vcmask 523264
  %v1677 = vsel %vm1675, %v1662, 0
  %1679 = vmatpush.msra.mxu0 0.0
  %1680 = vmatpush.msra.mxu0 0.0
  %1681 = vmatpush.msra.mxu0 0.0
  %1682 = vmatpush.msra.mxu0 0.0
  %1683 = vmatpush.msra.mxu0 0.0
  %1684 = vmatpush.msra.mxu0 0.0
  %1685 = vmatpush.msra.mxu0 0.0
  %1686 = vmatpush.msra.mxu0 0.0
  %1687 = vmatpush.msra.mxu0 %v1670
  %1688 = vmatpush.msra.mxu0 %v1669
  %1689 = vmatpush.msra.mxu0 %v1668
  %1690 = vmatpush.msra.mxu0 %v1667
  %1691 = vmatpush.msra.mxu0 %v1666
  %1692 = vmatpush.msra.mxu0 %v1665
  %1693 = vmatpush.msra.mxu0 %v1664
  %1694 = vmatpush.msra.mxu0 %v1663
  %1695 = vmatmul.f32.gmra.mxu0 %v1677
  %v1696 = vpop.f32.mrf.mxu0
  %v1697 = vadd.f32 %v1673, %v1696
  %1698 = vdwg.mxu0
  %v1699 = vxor.u32 %v1697, 2147483648
  %v1700 = vmul.f32 %v1699, 1.442695
  %v1701 = vpow.pop %v1700
  %v1702 = vadd.f32 %v1701, 1.0
  %v1703 = vrcp.pop %v1702
  %v1704 = vmul.f32 %v1702, %v1703
  %v1705 = vsub.f32 1.0, %v1704
  %v1706 = vmul.f32 %v1703, %v1705
  %v1707 = vadd.f32 %v1703, %v1706
  %vm1708 = vweird.f32 %v1702
  %vm1709 = vweird.f32 %v1703
  %vm1710 = vmor %vm1708, %vm1709
  %v1711 = vsel %vm1710, %v1703, %v1707
  %v1712 = vand.u32 2147483647, %v1702
  %vm1713 = vcmp.eq.f32.partialorder %v1712, 8.507059e+37
  %v1714 = vand.u32 %v1702, 2147483648
  %v1715 = vor.u32 1.1754944e-38, %v1714
  %v1716 = vsel %vm1713, %v1715, %v1711
  %v1717 = vmul.f32 1.0, %v1716
  %vm1718 = vcmask 1024
  %1719 = vst.msk [vmem:[%s22] sm:$0x3] %vm1718, %v1717
  // Predicated region
  $region90: #{graphnet_forward.1} parent=0 // pred_check
    _
  $region91: #{graphnet_forward.1} parent=0 // pred_check_branch
    %1721 = sbr.rel (0) target = $region93
  $region92: #{graphnet_forward.1} parent=0 // pred_region
    _
  $region93: #{graphnet_forward.1} parent=0 // pred_fallthru
    _
  // Predicated region
  $region94: #{graphnet_forward.1} parent=0 // pred_check
    _
  $region95: #{graphnet_forward.1} parent=0 // pred_check_branch
    %1723 = sbr.rel (0) target = $region97
  $region96: #{graphnet_forward.1} parent=0 // pred_region
    _
  $region97: #{graphnet_forward.1} parent=0 // pred_fallthru
    _

</llo_original>
